<compile_context>
chip_gen: v6e
topology: v6e:2x2x1
jax: 0.10.0
libtpu: 0.0.40
codegen_flags: <defaults>
</compile_context>

<pallas_src>
import math
import functools

import jax
import jax.numpy as jnp
from jax.experimental import pallas as pl
from jax.experimental.pallas import tpu as pltpu

NEG_SLOPE = 0.01  # nn.LeakyReLU() default


# --------------------------------------------------------------------------
# Fused kernel: all convs + LeakyReLUs + EqualLinear, one batch image per step
# --------------------------------------------------------------------------
def _make_gsb_kernel(num_layers, H, W, cin, depth):
    def kernel(x_ref, w0_ref, wrest_ref, bconv_ref, wlin_ref, blin_ref,
               out_ref, *pads):
        # x_ref     : (1, H, W, cin)                 f32 input block (one image)
        # w0_ref    : (9*cin, depth)                 bf16 layer-0 conv weight (tap-major)
        # wrest_ref : (max(L-1,1), 9*depth, depth)   bf16 conv weights, layers 1..L-1
        # bconv_ref : (L, 1, depth)                  f32 conv biases
        # wlin_ref  : (depth, depth)                 bf16 (W_equal * 1/sqrt(depth)).T
        # blin_ref  : (1, depth)                     f32 EqualLinear bias
        # out_ref   : (1, 1, depth)                  f32 output block
        # pads[l]   : VMEM ((H>>l)+2, (W>>l)+2, C_l) f32 zero-padded activation
        hi, wi = H, W
        y = None
        for l in range(num_layers):
            c = cin if l == 0 else depth
            ho, wo = hi // 2, wi // 2
            pad = pads[l]

            # Refresh the zero-padded activation buffer for this layer.
            # (Full memset each step: megacore-safe, negligible at these sizes.)
            pad[...] = jnp.zeros_like(pad)
            if l == 0:
                pad[pl.ds(1, hi), pl.ds(1, wi), :] = x_ref[0]
            else:
                pad[pl.ds(1, hi), pl.ds(1, wi), :] = y.reshape(hi, wi, depth)

            # im2col at the strided output positions: 9 taps -> one lane-dense
            # (ho*wo, 9*c) slab -> a single MXU matmul with K = 9*c.
            taps = []
            for ky in range(3):
                ry = pl.ds(ky, ho, stride=2) if ho > 1 else pl.ds(ky, 1)
                for kx in range(3):
                    rx = pl.ds(kx, wo, stride=2) if wo > 1 else pl.ds(kx, 1)
                    taps.append(pad[ry, rx, :])                 # (ho, wo, c)
            slab = jnp.concatenate(taps, axis=-1)               # (ho, wo, 9*c)
            slab = slab.reshape(ho * wo, 9 * c).astype(jnp.bfloat16)

            w = w0_ref[...] if l == 0 else wrest_ref[l - 1]     # (9*c, depth) bf16
            acc = jnp.dot(slab, w, preferred_element_type=jnp.float32)
            acc = acc + bconv_ref[l]                            # conv bias (f32)
            y = jnp.where(acc > 0, acc, NEG_SLOPE * acc)        # LeakyReLU (f32)
            hi, wi = ho, wo

        # Final spatial is 1x1  ->  y is (1, depth).  EqualLinear (activation=None).
        feat = y.astype(jnp.bfloat16)
        lin = jnp.dot(feat, wlin_ref[...], preferred_element_type=jnp.float32)
        out_ref[0] = (lin + blin_ref[...]).astype(out_ref.dtype)

    return kernel


# --------------------------------------------------------------------------
# Wrapper (accepts PyTorch-style NCHW)
# --------------------------------------------------------------------------
def gradual_style_block(x_nchw, params):
    x = jnp.transpose(x_nchw, (0, 2, 3, 1)).astype(jnp.float32)      # NHWC
    N, H, W, cin = x.shape
    depth = int(params['w0'].shape[1])
    L = int(params['num_layers'])
    assert H == W and H == (1 << L), "GradualStyleBlock expects power-of-2 spatial"

    kernel = _make_gsb_kernel(L, H, W, cin, depth)

    w0, wrest = params['w0'], params['wrest']
    bconv, wlin, blin = params['bconv'], params['wlin'], params['blin']

    scratch = [pltpu.VMEM((H + 2, W + 2, cin), jnp.float32)]
    scratch += [pltpu.VMEM(((H >> l) + 2, (W >> l) + 2, depth), jnp.float32)
                for l in range(1, L)]

    out = pl.pallas_call(
        kernel,
        out_shape=jax.ShapeDtypeStruct((N, 1, depth), jnp.float32),
        grid=(N,),
        in_specs=[
            pl.BlockSpec((1, H, W, cin), lambda n: (n, 0, 0, 0)),
            pl.BlockSpec(tuple(w0.shape), lambda n: (0, 0)),
            pl.BlockSpec(tuple(wrest.shape), lambda n: (0, 0, 0)),
            pl.BlockSpec(tuple(bconv.shape), lambda n: (0, 0, 0)),
            pl.BlockSpec(tuple(wlin.shape), lambda n: (0, 0)),
            pl.BlockSpec(tuple(blin.shape), lambda n: (0, 0)),
        ],
        out_specs=pl.BlockSpec((1, 1, depth), lambda n: (n, 0, 0)),
        scratch_shapes=scratch,
        compiler_params=pltpu.CompilerParams(
            dimension_semantics=("parallel",)),
    )(x, w0, wrest, bconv, wlin, blin)

    return out.reshape(N, depth)


# --------------------------------------------------------------------------
# Deterministic parameter init (shapes follow the PyTorch module __init__)
# --------------------------------------------------------------------------
def init_params(key, cin, depth, spatial):
    L = int(round(math.log2(spatial)))           # num_pools conv layers total
    keys = jax.random.split(key, 2 * L + 1)

    w_oihw, b_conv = [], []
    for l in range(L):
        c = cin if l == 0 else depth
        std = 1.0 / math.sqrt(9 * c)             # ~ PyTorch Conv2d default scale
        w_oihw.append(std * jax.random.normal(keys[2 * l], (depth, c, 3, 3),
                                              jnp.float32))
        b_conv.append(std * jax.random.normal(keys[2 * l + 1], (depth,),
                                              jnp.float32))

    # EqualLinear(out_c, out_c, lr_mul=1): weight = randn(out,in)/lr_mul,
    # scale = 1/sqrt(in_dim), bias = zeros (bias_init=0).
    wlin_raw = jax.random.normal(keys[2 * L], (depth, depth), jnp.float32)
    eq_scale = 1.0 / math.sqrt(depth)
    wlin_eff = (wlin_raw * eq_scale).T                           # (in, out)
    blin = jnp.zeros((depth,), jnp.float32)

    def to_tapmat(w):  # OIHW -> (ky*kx*cin, cout), tap-major (ky, kx, cin)
        o, i, kh, kw = w.shape
        return jnp.transpose(w, (2, 3, 1, 0)).reshape(kh * kw * i, o)

    w0 = to_tapmat(w_oihw[0]).astype(jnp.bfloat16)
    if L > 1:
        wrest = jnp.stack([to_tapmat(w) for w in w_oihw[1:]]).astype(jnp.bfloat16)
    else:
        wrest = jnp.zeros((1, 9 * depth, depth), jnp.bfloat16)   # unused placeholder

    return {
        'num_layers': L,
        'w0': w0,
        'wrest': wrest,
        'bconv': jnp.stack(b_conv).reshape(L, 1, depth),
        'wlin': wlin_eff.astype(jnp.bfloat16),
        'blin': blin.reshape(1, depth),
        # f32 reference-only copies
        'w_hwio_ref': [jnp.transpose(w, (2, 3, 1, 0)) for w in w_oihw],
        'b_conv_ref': b_conv,
        'wlin_ref': wlin_eff,
        'blin_ref': blin,
    }


# --------------------------------------------------------------------------
# Pure-JAX f32 reference (numeric sanity check only)
# --------------------------------------------------------------------------
def ref_forward(x_nchw, params):
    hp = jax.lax.Precision.HIGHEST
    x = jnp.transpose(x_nchw, (0, 2, 3, 1)).astype(jnp.float32)
    for w_hwio, b in zip(params['w_hwio_ref'], params['b_conv_ref']):
        x = jax.lax.conv_general_dilated(
            x, w_hwio, window_strides=(2, 2), padding=[(1, 1), (1, 1)],
            dimension_numbers=('NHWC', 'HWIO', 'NHWC'), precision=hp)
        x = x + b
        x = jnp.where(x > 0, x, NEG_SLOPE * x)
    feat = x.reshape(x.shape[0], -1)                             # spatial is 1x1
    return feat @ params['wlin_ref'] + params['blin_ref']


if __name__ == "__main__":
    key = jax.random.PRNGKey(0)
    k_x, k_p = jax.random.split(key)

    # small shapes consistent with the module: in_c=16, out_c=32, spatial=16
    N, cin, spatial, depth = 2, 16, 16, 32

    x = jax.random.normal(k_x, (N, cin, spatial, spatial), jnp.float32)  # NCHW
    params = init_params(k_p, cin, depth, spatial)

    out = jax.block_until_ready(gradual_style_block(x, params))
    assert out.shape == (N, depth), out.shape

    ref = ref_forward(x, params)
    err = float(jnp.max(jnp.abs(out - ref)))
    scale = float(jnp.max(jnp.abs(ref)))
    # bf16 matmul operands (f32 accumulation) -> allow a small relative tolerance
    assert err <= 0.05 * scale + 1e-2, f"max abs diff {err} (ref scale {scale})"
    print("KERNEL_OK")
</pallas_src>

<mosaic_0001>
module attributes {stable_mosaic.version = 11 : i64} {
  func.func @kernel(%arg0: i32, %arg1: memref<1x16x16x16xf32, #tpu.memory_space<vmem>>, %arg2: memref<144x32xbf16, #tpu.memory_space<vmem>>, %arg3: memref<3x288x32xbf16, #tpu.memory_space<vmem>>, %arg4: memref<4x1x32xf32, #tpu.memory_space<vmem>>, %arg5: memref<32x32xbf16, #tpu.memory_space<vmem>>, %arg6: memref<1x32xf32, #tpu.memory_space<vmem>>, %arg7: memref<1x1x32xf32, #tpu.memory_space<vmem>>, %arg8: memref<18x18x16xf32, #tpu.memory_space<vmem>>, %arg9: memref<10x10x32xf32, #tpu.memory_space<vmem>>, %arg10: memref<6x6x32xf32, #tpu.memory_space<vmem>>, %arg11: memref<4x4x32xf32, #tpu.memory_space<vmem>>) attributes {dimension_semantics = [#tpu.dimension_semantics<parallel>], iteration_bounds = array<i64: 2>, scalar_prefetch = 0 : i64, scratch_operands = 4 : i64, tpu.core_type = #tpu.core_type<tc>, window_params = [{transform_indices = @transform_0, window_bounds = array<i64: 1, 16, 16, 16>}, {pipeline_mode = #tpu.pipeline_mode<synchronous>, transform_indices = @transform_1, window_bounds = array<i64: 144, 32>}, {pipeline_mode = #tpu.pipeline_mode<synchronous>, transform_indices = @transform_2, window_bounds = array<i64: 3, 288, 32>}, {pipeline_mode = #tpu.pipeline_mode<synchronous>, transform_indices = @transform_3, window_bounds = array<i64: 4, 1, 32>}, {pipeline_mode = #tpu.pipeline_mode<synchronous>, transform_indices = @transform_4, window_bounds = array<i64: 32, 32>}, {pipeline_mode = #tpu.pipeline_mode<synchronous>, transform_indices = @transform_5, window_bounds = array<i64: 1, 32>}, {transform_indices = @transform_6, window_bounds = array<i64: 1, 1, 32>}]} {
    %cst = arith.constant 0.000000e+00 : f32
    %0 = vector.broadcast %cst : f32 to vector<18x18x16xf32>
    %c0 = arith.constant 0 : index
    %c0_0 = arith.constant 0 : index
    %c0_1 = arith.constant 0 : index
    %1 = vector.load %arg8[%c0, %c0_0, %c0_1] : memref<18x18x16xf32, #tpu.memory_space<vmem>>, vector<18x18x16xf32>
    tpu.vector_store %arg8[%c0, %c0_0, %c0_1], %0 {strides = array<i32>} : memref<18x18x16xf32, #tpu.memory_space<vmem>>, vector<18x18x16xf32>,
    %c0_2 = arith.constant 0 : index
    %c0_3 = arith.constant 0 : index
    %c0_4 = arith.constant 0 : index
    %c0_5 = arith.constant 0 : index
    %2 = vector.load %arg1[%c0_2, %c0_3, %c0_4, %c0_5] : memref<1x16x16x16xf32, #tpu.memory_space<vmem>>, vector<1x16x16x16xf32>
    %3 = vector.shape_cast %2 : vector<1x16x16x16xf32> to vector<16x16x16xf32>
    %c1 = arith.constant 1 : index
    %c1_6 = arith.constant 1 : index
    %c0_7 = arith.constant 0 : index
    %4 = vector.load %arg8[%c1, %c1_6, %c0_7] : memref<18x18x16xf32, #tpu.memory_space<vmem>>, vector<16x16x16xf32>
    tpu.vector_store %arg8[%c1, %c1_6, %c0_7], %3 {strides = array<i32>} : memref<18x18x16xf32, #tpu.memory_space<vmem>>, vector<16x16x16xf32>,
    %c0_8 = arith.constant 0 : index
    %c0_9 = arith.constant 0 : index
    %c0_10 = arith.constant 0 : index
    %5 = tpu.strided_load %arg8[%c0_8, %c0_9, %c0_10] {strides = array<i32: 2, 2, 1>} : memref<18x18x16xf32, #tpu.memory_space<vmem>>, vector<8x8x16xf32>
    %c0_11 = arith.constant 0 : index
    %c1_12 = arith.constant 1 : index
    %c0_13 = arith.constant 0 : index
    %6 = tpu.strided_load %arg8[%c0_11, %c1_12, %c0_13] {strides = array<i32: 2, 2, 1>} : memref<18x18x16xf32, #tpu.memory_space<vmem>>, vector<8x8x16xf32>
    %c0_14 = arith.constant 0 : index
    %c2 = arith.constant 2 : index
    %c0_15 = arith.constant 0 : index
    %7 = tpu.strided_load %arg8[%c0_14, %c2, %c0_15] {strides = array<i32: 2, 2, 1>} : memref<18x18x16xf32, #tpu.memory_space<vmem>>, vector<8x8x16xf32>
    %c1_16 = arith.constant 1 : index
    %c0_17 = arith.constant 0 : index
    %c0_18 = arith.constant 0 : index
    %8 = tpu.strided_load %arg8[%c1_16, %c0_17, %c0_18] {strides = array<i32: 2, 2, 1>} : memref<18x18x16xf32, #tpu.memory_space<vmem>>, vector<8x8x16xf32>
    %c1_19 = arith.constant 1 : index
    %c1_20 = arith.constant 1 : index
    %c0_21 = arith.constant 0 : index
    %9 = tpu.strided_load %arg8[%c1_19, %c1_20, %c0_21] {strides = array<i32: 2, 2, 1>} : memref<18x18x16xf32, #tpu.memory_space<vmem>>, vector<8x8x16xf32>
    %c1_22 = arith.constant 1 : index
    %c2_23 = arith.constant 2 : index
    %c0_24 = arith.constant 0 : index
    %10 = tpu.strided_load %arg8[%c1_22, %c2_23, %c0_24] {strides = array<i32: 2, 2, 1>} : memref<18x18x16xf32, #tpu.memory_space<vmem>>, vector<8x8x16xf32>
    %c2_25 = arith.constant 2 : index
    %c0_26 = arith.constant 0 : index
    %c0_27 = arith.constant 0 : index
    %11 = tpu.strided_load %arg8[%c2_25, %c0_26, %c0_27] {strides = array<i32: 2, 2, 1>} : memref<18x18x16xf32, #tpu.memory_space<vmem>>, vector<8x8x16xf32>
    %c2_28 = arith.constant 2 : index
    %c1_29 = arith.constant 1 : index
    %c0_30 = arith.constant 0 : index
    %12 = tpu.strided_load %arg8[%c2_28, %c1_29, %c0_30] {strides = array<i32: 2, 2, 1>} : memref<18x18x16xf32, #tpu.memory_space<vmem>>, vector<8x8x16xf32>
    %c2_31 = arith.constant 2 : index
    %c2_32 = arith.constant 2 : index
    %c0_33 = arith.constant 0 : index
    %13 = tpu.strided_load %arg8[%c2_31, %c2_32, %c0_33] {strides = array<i32: 2, 2, 1>} : memref<18x18x16xf32, #tpu.memory_space<vmem>>, vector<8x8x16xf32>
    %14 = tpu.concatenate %5, %6, %7, %8, %9, %10, %11, %12, %13 in 2 : vector<8x8x16xf32>, vector<8x8x16xf32>, vector<8x8x16xf32>, vector<8x8x16xf32>, vector<8x8x16xf32>, vector<8x8x16xf32>, vector<8x8x16xf32>, vector<8x8x16xf32>, vector<8x8x16xf32> -> vector<8x8x144xf32>
    %15 = vector.shape_cast %14 : vector<8x8x144xf32> to vector<64x144xf32>
    %16 = arith.truncf %15 : vector<64x144xf32> to vector<64x144xbf16>
    %c0_34 = arith.constant 0 : index
    %c0_35 = arith.constant 0 : index
    %17 = vector.load %arg2[%c0_34, %c0_35] : memref<144x32xbf16, #tpu.memory_space<vmem>>, vector<144x32xbf16>
    %cst_36 = arith.constant dense<0.000000e+00> : vector<64x32xf32>
    %18 = tpu.matmul %16, %17, %cst_36 {dimension_numbers = #tpu.dot_dimension_numbers<[1], [0], [0], [1], [0, 0, 1, 1], [], []>} : vector<64x144xbf16>, vector<144x32xbf16>, vector<64x32xf32> -> vector<64x32xf32>
    %c0_37 = arith.constant 0 : index
    %c0_38 = arith.constant 0 : index
    %c0_39 = arith.constant 0 : index
    %19 = vector.load %arg4[%c0_37, %c0_38, %c0_39] : memref<4x1x32xf32, #tpu.memory_space<vmem>>, vector<1x1x32xf32>
    %20 = vector.shape_cast %19 : vector<1x1x32xf32> to vector<1x32xf32>
    %21 = vector.broadcast %20 : vector<1x32xf32> to vector<64x32xf32>
    %22 = arith.addf %18, %21 : vector<64x32xf32>
    %cst_40 = arith.constant 0.000000e+00 : f32
    %23 = vector.broadcast %cst_40 : f32 to vector<64x32xf32>
    %24 = arith.cmpf ogt, %22, %23 : vector<64x32xf32>
    %cst_41 = arith.constant 0.00999999977 : f32
    %25 = vector.broadcast %cst_41 : f32 to vector<64x32xf32>
    %26 = arith.mulf %25, %22 : vector<64x32xf32>
    %27 = arith.select %24, %22, %26 : vector<64x32xi1>, vector<64x32xf32>
    %cst_42 = arith.constant 0.000000e+00 : f32
    %28 = vector.broadcast %cst_42 : f32 to vector<10x10x32xf32>
    %c0_43 = arith.constant 0 : index
    %c0_44 = arith.constant 0 : index
    %c0_45 = arith.constant 0 : index
    %29 = vector.load %arg9[%c0_43, %c0_44, %c0_45] : memref<10x10x32xf32, #tpu.memory_space<vmem>>, vector<10x10x32xf32>
    tpu.vector_store %arg9[%c0_43, %c0_44, %c0_45], %28 {strides = array<i32>} : memref<10x10x32xf32, #tpu.memory_space<vmem>>, vector<10x10x32xf32>,
    %30 = vector.shape_cast %27 : vector<64x32xf32> to vector<8x8x32xf32>
    %c1_46 = arith.constant 1 : index
    %c1_47 = arith.constant 1 : index
    %c0_48 = arith.constant 0 : index
    %31 = vector.load %arg9[%c1_46, %c1_47, %c0_48] : memref<10x10x32xf32, #tpu.memory_space<vmem>>, vector<8x8x32xf32>
    tpu.vector_store %arg9[%c1_46, %c1_47, %c0_48], %30 {strides = array<i32>} : memref<10x10x32xf32, #tpu.memory_space<vmem>>, vector<8x8x32xf32>,
    %c0_49 = arith.constant 0 : index
    %c0_50 = arith.constant 0 : index
    %c0_51 = arith.constant 0 : index
    %32 = tpu.strided_load %arg9[%c0_49, %c0_50, %c0_51] {strides = array<i32: 2, 2, 1>} : memref<10x10x32xf32, #tpu.memory_space<vmem>>, vector<4x4x32xf32>
    %c0_52 = arith.constant 0 : index
    %c1_53 = arith.constant 1 : index
    %c0_54 = arith.constant 0 : index
    %33 = tpu.strided_load %arg9[%c0_52, %c1_53, %c0_54] {strides = array<i32: 2, 2, 1>} : memref<10x10x32xf32, #tpu.memory_space<vmem>>, vector<4x4x32xf32>
    %c0_55 = arith.constant 0 : index
    %c2_56 = arith.constant 2 : index
    %c0_57 = arith.constant 0 : index
    %34 = tpu.strided_load %arg9[%c0_55, %c2_56, %c0_57] {strides = array<i32: 2, 2, 1>} : memref<10x10x32xf32, #tpu.memory_space<vmem>>, vector<4x4x32xf32>
    %c1_58 = arith.constant 1 : index
    %c0_59 = arith.constant 0 : index
    %c0_60 = arith.constant 0 : index
    %35 = tpu.strided_load %arg9[%c1_58, %c0_59, %c0_60] {strides = array<i32: 2, 2, 1>} : memref<10x10x32xf32, #tpu.memory_space<vmem>>, vector<4x4x32xf32>
    %c1_61 = arith.constant 1 : index
    %c1_62 = arith.constant 1 : index
    %c0_63 = arith.constant 0 : index
    %36 = tpu.strided_load %arg9[%c1_61, %c1_62, %c0_63] {strides = array<i32: 2, 2, 1>} : memref<10x10x32xf32, #tpu.memory_space<vmem>>, vector<4x4x32xf32>
    %c1_64 = arith.constant 1 : index
    %c2_65 = arith.constant 2 : index
    %c0_66 = arith.constant 0 : index
    %37 = tpu.strided_load %arg9[%c1_64, %c2_65, %c0_66] {strides = array<i32: 2, 2, 1>} : memref<10x10x32xf32, #tpu.memory_space<vmem>>, vector<4x4x32xf32>
    %c2_67 = arith.constant 2 : index
    %c0_68 = arith.constant 0 : index
    %c0_69 = arith.constant 0 : index
    %38 = tpu.strided_load %arg9[%c2_67, %c0_68, %c0_69] {strides = array<i32: 2, 2, 1>} : memref<10x10x32xf32, #tpu.memory_space<vmem>>, vector<4x4x32xf32>
    %c2_70 = arith.constant 2 : index
    %c1_71 = arith.constant 1 : index
    %c0_72 = arith.constant 0 : index
    %39 = tpu.strided_load %arg9[%c2_70, %c1_71, %c0_72] {strides = array<i32: 2, 2, 1>} : memref<10x10x32xf32, #tpu.memory_space<vmem>>, vector<4x4x32xf32>
    %c2_73 = arith.constant 2 : index
    %c2_74 = arith.constant 2 : index
    %c0_75 = arith.constant 0 : index
    %40 = tpu.strided_load %arg9[%c2_73, %c2_74, %c0_75] {strides = array<i32: 2, 2, 1>} : memref<10x10x32xf32, #tpu.memory_space<vmem>>, vector<4x4x32xf32>
    %41 = tpu.concatenate %32, %33, %34, %35, %36, %37, %38, %39, %40 in 2 : vector<4x4x32xf32>, vector<4x4x32xf32>, vector<4x4x32xf32>, vector<4x4x32xf32>, vector<4x4x32xf32>, vector<4x4x32xf32>, vector<4x4x32xf32>, vector<4x4x32xf32>, vector<4x4x32xf32> -> vector<4x4x288xf32>
    %42 = vector.shape_cast %41 : vector<4x4x288xf32> to vector<16x288xf32>
    %43 = arith.truncf %42 : vector<16x288xf32> to vector<16x288xbf16>
    %c0_76 = arith.constant 0 : index
    %c0_77 = arith.constant 0 : index
    %c0_78 = arith.constant 0 : index
    %44 = vector.load %arg3[%c0_76, %c0_77, %c0_78] : memref<3x288x32xbf16, #tpu.memory_space<vmem>>, vector<1x288x32xbf16>
    %45 = vector.shape_cast %44 : vector<1x288x32xbf16> to vector<288x32xbf16>
    %cst_79 = arith.constant dense<0.000000e+00> : vector<16x32xf32>
    %46 = tpu.matmul %43, %45, %cst_79 {dimension_numbers = #tpu.dot_dimension_numbers<[1], [0], [0], [1], [0, 0, 1, 1], [], []>} : vector<16x288xbf16>, vector<288x32xbf16>, vector<16x32xf32> -> vector<16x32xf32>
    %c1_80 = arith.constant 1 : index
    %c0_81 = arith.constant 0 : index
    %c0_82 = arith.constant 0 : index
    %47 = vector.load %arg4[%c1_80, %c0_81, %c0_82] : memref<4x1x32xf32, #tpu.memory_space<vmem>>, vector<1x1x32xf32>
    %48 = vector.shape_cast %47 : vector<1x1x32xf32> to vector<1x32xf32>
    %49 = vector.broadcast %48 : vector<1x32xf32> to vector<16x32xf32>
    %50 = arith.addf %46, %49 : vector<16x32xf32>
    %cst_83 = arith.constant 0.000000e+00 : f32
    %51 = vector.broadcast %cst_83 : f32 to vector<16x32xf32>
    %52 = arith.cmpf ogt, %50, %51 : vector<16x32xf32>
    %cst_84 = arith.constant 0.00999999977 : f32
    %53 = vector.broadcast %cst_84 : f32 to vector<16x32xf32>
    %54 = arith.mulf %53, %50 : vector<16x32xf32>
    %55 = arith.select %52, %50, %54 : vector<16x32xi1>, vector<16x32xf32>
    %cst_85 = arith.constant 0.000000e+00 : f32
    %56 = vector.broadcast %cst_85 : f32 to vector<6x6x32xf32>
    %c0_86 = arith.constant 0 : index
    %c0_87 = arith.constant 0 : index
    %c0_88 = arith.constant 0 : index
    %57 = vector.load %arg10[%c0_86, %c0_87, %c0_88] : memref<6x6x32xf32, #tpu.memory_space<vmem>>, vector<6x6x32xf32>
    tpu.vector_store %arg10[%c0_86, %c0_87, %c0_88], %56 {strides = array<i32>} : memref<6x6x32xf32, #tpu.memory_space<vmem>>, vector<6x6x32xf32>,
    %58 = vector.shape_cast %55 : vector<16x32xf32> to vector<4x4x32xf32>
    %c1_89 = arith.constant 1 : index
    %c1_90 = arith.constant 1 : index
    %c0_91 = arith.constant 0 : index
    %59 = vector.load %arg10[%c1_89, %c1_90, %c0_91] : memref<6x6x32xf32, #tpu.memory_space<vmem>>, vector<4x4x32xf32>
    tpu.vector_store %arg10[%c1_89, %c1_90, %c0_91], %58 {strides = array<i32>} : memref<6x6x32xf32, #tpu.memory_space<vmem>>, vector<4x4x32xf32>,
    %c0_92 = arith.constant 0 : index
    %c0_93 = arith.constant 0 : index
    %c0_94 = arith.constant 0 : index
    %60 = tpu.strided_load %arg10[%c0_92, %c0_93, %c0_94] {strides = array<i32: 2, 2, 1>} : memref<6x6x32xf32, #tpu.memory_space<vmem>>, vector<2x2x32xf32>
    %c0_95 = arith.constant 0 : index
    %c1_96 = arith.constant 1 : index
    %c0_97 = arith.constant 0 : index
    %61 = tpu.strided_load %arg10[%c0_95, %c1_96, %c0_97] {strides = array<i32: 2, 2, 1>} : memref<6x6x32xf32, #tpu.memory_space<vmem>>, vector<2x2x32xf32>
    %c0_98 = arith.constant 0 : index
    %c2_99 = arith.constant 2 : index
    %c0_100 = arith.constant 0 : index
    %62 = tpu.strided_load %arg10[%c0_98, %c2_99, %c0_100] {strides = array<i32: 2, 2, 1>} : memref<6x6x32xf32, #tpu.memory_space<vmem>>, vector<2x2x32xf32>
    %c1_101 = arith.constant 1 : index
    %c0_102 = arith.constant 0 : index
    %c0_103 = arith.constant 0 : index
    %63 = tpu.strided_load %arg10[%c1_101, %c0_102, %c0_103] {strides = array<i32: 2, 2, 1>} : memref<6x6x32xf32, #tpu.memory_space<vmem>>, vector<2x2x32xf32>
    %c1_104 = arith.constant 1 : index
    %c1_105 = arith.constant 1 : index
    %c0_106 = arith.constant 0 : index
    %64 = tpu.strided_load %arg10[%c1_104, %c1_105, %c0_106] {strides = array<i32: 2, 2, 1>} : memref<6x6x32xf32, #tpu.memory_space<vmem>>, vector<2x2x32xf32>
    %c1_107 = arith.constant 1 : index
    %c2_108 = arith.constant 2 : index
    %c0_109 = arith.constant 0 : index
    %65 = tpu.strided_load %arg10[%c1_107, %c2_108, %c0_109] {strides = array<i32: 2, 2, 1>} : memref<6x6x32xf32, #tpu.memory_space<vmem>>, vector<2x2x32xf32>
    %c2_110 = arith.constant 2 : index
    %c0_111 = arith.constant 0 : index
    %c0_112 = arith.constant 0 : index
    %66 = tpu.strided_load %arg10[%c2_110, %c0_111, %c0_112] {strides = array<i32: 2, 2, 1>} : memref<6x6x32xf32, #tpu.memory_space<vmem>>, vector<2x2x32xf32>
    %c2_113 = arith.constant 2 : index
    %c1_114 = arith.constant 1 : index
    %c0_115 = arith.constant 0 : index
    %67 = tpu.strided_load %arg10[%c2_113, %c1_114, %c0_115] {strides = array<i32: 2, 2, 1>} : memref<6x6x32xf32, #tpu.memory_space<vmem>>, vector<2x2x32xf32>
    %c2_116 = arith.constant 2 : index
    %c2_117 = arith.constant 2 : index
    %c0_118 = arith.constant 0 : index
    %68 = tpu.strided_load %arg10[%c2_116, %c2_117, %c0_118] {strides = array<i32: 2, 2, 1>} : memref<6x6x32xf32, #tpu.memory_space<vmem>>, vector<2x2x32xf32>
    %69 = tpu.concatenate %60, %61, %62, %63, %64, %65, %66, %67, %68 in 2 : vector<2x2x32xf32>, vector<2x2x32xf32>, vector<2x2x32xf32>, vector<2x2x32xf32>, vector<2x2x32xf32>, vector<2x2x32xf32>, vector<2x2x32xf32>, vector<2x2x32xf32>, vector<2x2x32xf32> -> vector<2x2x288xf32>
    %70 = vector.shape_cast %69 : vector<2x2x288xf32> to vector<4x288xf32>
    %71 = arith.truncf %70 : vector<4x288xf32> to vector<4x288xbf16>
    %c1_119 = arith.constant 1 : index
    %c0_120 = arith.constant 0 : index
    %c0_121 = arith.constant 0 : index
    %72 = vector.load %arg3[%c1_119, %c0_120, %c0_121] : memref<3x288x32xbf16, #tpu.memory_space<vmem>>, vector<1x288x32xbf16>
    %73 = vector.shape_cast %72 : vector<1x288x32xbf16> to vector<288x32xbf16>
    %cst_122 = arith.constant dense<0.000000e+00> : vector<4x32xf32>
    %74 = tpu.matmul %71, %73, %cst_122 {dimension_numbers = #tpu.dot_dimension_numbers<[1], [0], [0], [1], [0, 0, 1, 1], [], []>} : vector<4x288xbf16>, vector<288x32xbf16>, vector<4x32xf32> -> vector<4x32xf32>
    %c2_123 = arith.constant 2 : index
    %c0_124 = arith.constant 0 : index
    %c0_125 = arith.constant 0 : index
    %75 = vector.load %arg4[%c2_123, %c0_124, %c0_125] : memref<4x1x32xf32, #tpu.memory_space<vmem>>, vector<1x1x32xf32>
    %76 = vector.shape_cast %75 : vector<1x1x32xf32> to vector<1x32xf32>
    %77 = vector.broadcast %76 : vector<1x32xf32> to vector<4x32xf32>
    %78 = arith.addf %74, %77 : vector<4x32xf32>
    %cst_126 = arith.constant 0.000000e+00 : f32
    %79 = vector.broadcast %cst_126 : f32 to vector<4x32xf32>
    %80 = arith.cmpf ogt, %78, %79 : vector<4x32xf32>
    %cst_127 = arith.constant 0.00999999977 : f32
    %81 = vector.broadcast %cst_127 : f32 to vector<4x32xf32>
    %82 = arith.mulf %81, %78 : vector<4x32xf32>
    %83 = arith.select %80, %78, %82 : vector<4x32xi1>, vector<4x32xf32>
    %cst_128 = arith.constant 0.000000e+00 : f32
    %84 = vector.broadcast %cst_128 : f32 to vector<4x4x32xf32>
    %c0_129 = arith.constant 0 : index
    %c0_130 = arith.constant 0 : index
    %c0_131 = arith.constant 0 : index
    %85 = vector.load %arg11[%c0_129, %c0_130, %c0_131] : memref<4x4x32xf32, #tpu.memory_space<vmem>>, vector<4x4x32xf32>
    tpu.vector_store %arg11[%c0_129, %c0_130, %c0_131], %84 {strides = array<i32>} : memref<4x4x32xf32, #tpu.memory_space<vmem>>, vector<4x4x32xf32>,
    %86 = vector.shape_cast %83 : vector<4x32xf32> to vector<2x2x32xf32>
    %c1_132 = arith.constant 1 : index
    %c1_133 = arith.constant 1 : index
    %c0_134 = arith.constant 0 : index
    %87 = vector.load %arg11[%c1_132, %c1_133, %c0_134] : memref<4x4x32xf32, #tpu.memory_space<vmem>>, vector<2x2x32xf32>
    tpu.vector_store %arg11[%c1_132, %c1_133, %c0_134], %86 {strides = array<i32>} : memref<4x4x32xf32, #tpu.memory_space<vmem>>, vector<2x2x32xf32>,
    %c0_135 = arith.constant 0 : index
    %c0_136 = arith.constant 0 : index
    %c0_137 = arith.constant 0 : index
    %88 = vector.load %arg11[%c0_135, %c0_136, %c0_137] : memref<4x4x32xf32, #tpu.memory_space<vmem>>, vector<1x1x32xf32>
    %c0_138 = arith.constant 0 : index
    %c1_139 = arith.constant 1 : index
    %c0_140 = arith.constant 0 : index
    %89 = vector.load %arg11[%c0_138, %c1_139, %c0_140] : memref<4x4x32xf32, #tpu.memory_space<vmem>>, vector<1x1x32xf32>
    %c0_141 = arith.constant 0 : index
    %c2_142 = arith.constant 2 : index
    %c0_143 = arith.constant 0 : index
    %90 = vector.load %arg11[%c0_141, %c2_142, %c0_143] : memref<4x4x32xf32, #tpu.memory_space<vmem>>, vector<1x1x32xf32>
    %c1_144 = arith.constant 1 : index
    %c0_145 = arith.constant 0 : index
    %c0_146 = arith.constant 0 : index
    %91 = vector.load %arg11[%c1_144, %c0_145, %c0_146] : memref<4x4x32xf32, #tpu.memory_space<vmem>>, vector<1x1x32xf32>
    %c1_147 = arith.constant 1 : index
    %c1_148 = arith.constant 1 : index
    %c0_149 = arith.constant 0 : index
    %92 = vector.load %arg11[%c1_147, %c1_148, %c0_149] : memref<4x4x32xf32, #tpu.memory_space<vmem>>, vector<1x1x32xf32>
    %c1_150 = arith.constant 1 : index
    %c2_151 = arith.constant 2 : index
    %c0_152 = arith.constant 0 : index
    %93 = vector.load %arg11[%c1_150, %c2_151, %c0_152] : memref<4x4x32xf32, #tpu.memory_space<vmem>>, vector<1x1x32xf32>
    %c2_153 = arith.constant 2 : index
    %c0_154 = arith.constant 0 : index
    %c0_155 = arith.constant 0 : index
    %94 = vector.load %arg11[%c2_153, %c0_154, %c0_155] : memref<4x4x32xf32, #tpu.memory_space<vmem>>, vector<1x1x32xf32>
    %c2_156 = arith.constant 2 : index
    %c1_157 = arith.constant 1 : index
    %c0_158 = arith.constant 0 : index
    %95 = vector.load %arg11[%c2_156, %c1_157, %c0_158] : memref<4x4x32xf32, #tpu.memory_space<vmem>>, vector<1x1x32xf32>
    %c2_159 = arith.constant 2 : index
    %c2_160 = arith.constant 2 : index
    %c0_161 = arith.constant 0 : index
    %96 = vector.load %arg11[%c2_159, %c2_160, %c0_161] : memref<4x4x32xf32, #tpu.memory_space<vmem>>, vector<1x1x32xf32>
    %97 = tpu.concatenate %88, %89, %90, %91, %92, %93, %94, %95, %96 in 2 : vector<1x1x32xf32>, vector<1x1x32xf32>, vector<1x1x32xf32>, vector<1x1x32xf32>, vector<1x1x32xf32>, vector<1x1x32xf32>, vector<1x1x32xf32>, vector<1x1x32xf32>, vector<1x1x32xf32> -> vector<1x1x288xf32>
    %98 = vector.shape_cast %97 : vector<1x1x288xf32> to vector<1x288xf32>
    %99 = arith.truncf %98 : vector<1x288xf32> to vector<1x288xbf16>
    %c2_162 = arith.constant 2 : index
    %c0_163 = arith.constant 0 : index
    %c0_164 = arith.constant 0 : index
    %100 = vector.load %arg3[%c2_162, %c0_163, %c0_164] : memref<3x288x32xbf16, #tpu.memory_space<vmem>>, vector<1x288x32xbf16>
    %101 = vector.shape_cast %100 : vector<1x288x32xbf16> to vector<288x32xbf16>
    %cst_165 = arith.constant dense<0.000000e+00> : vector<1x32xf32>
    %102 = tpu.matmul %99, %101, %cst_165 {dimension_numbers = #tpu.dot_dimension_numbers<[1], [0], [0], [1], [0, 0, 1, 1], [], []>} : vector<1x288xbf16>, vector<288x32xbf16>, vector<1x32xf32> -> vector<1x32xf32>
    %c3 = arith.constant 3 : index
    %c0_166 = arith.constant 0 : index
    %c0_167 = arith.constant 0 : index
    %103 = vector.load %arg4[%c3, %c0_166, %c0_167] : memref<4x1x32xf32, #tpu.memory_space<vmem>>, vector<1x1x32xf32>
    %104 = vector.shape_cast %103 : vector<1x1x32xf32> to vector<1x32xf32>
    %105 = arith.addf %102, %104 : vector<1x32xf32>
    %cst_168 = arith.constant 0.000000e+00 : f32
    %106 = vector.broadcast %cst_168 : f32 to vector<1x32xf32>
    %107 = arith.cmpf ogt, %105, %106 : vector<1x32xf32>
    %cst_169 = arith.constant 0.00999999977 : f32
    %108 = vector.broadcast %cst_169 : f32 to vector<1x32xf32>
    %109 = arith.mulf %108, %105 : vector<1x32xf32>
    %110 = arith.select %107, %105, %109 : vector<1x32xi1>, vector<1x32xf32>
    %111 = arith.truncf %110 : vector<1x32xf32> to vector<1x32xbf16>
    %c0_170 = arith.constant 0 : index
    %c0_171 = arith.constant 0 : index
    %112 = vector.load %arg5[%c0_170, %c0_171] : memref<32x32xbf16, #tpu.memory_space<vmem>>, vector<32x32xbf16>
    %cst_172 = arith.constant dense<0.000000e+00> : vector<1x32xf32>
    %113 = tpu.matmul %111, %112, %cst_172 {dimension_numbers = #tpu.dot_dimension_numbers<[1], [0], [0], [1], [0, 0, 1, 1], [], []>} : vector<1x32xbf16>, vector<32x32xbf16>, vector<1x32xf32> -> vector<1x32xf32>
    %c0_173 = arith.constant 0 : index
    %c0_174 = arith.constant 0 : index
    %114 = vector.load %arg6[%c0_173, %c0_174] : memref<1x32xf32, #tpu.memory_space<vmem>>, vector<1x32xf32>
    %115 = arith.addf %113, %114 : vector<1x32xf32>
    %c0_175 = arith.constant 0 : index
    %c0_176 = arith.constant 0 : index
    %c0_177 = arith.constant 0 : index
    %116 = vector.load %arg7[%c0_175, %c0_176, %c0_177] : memref<1x1x32xf32, #tpu.memory_space<vmem>>, vector<1x1x32xf32>
    %117 = vector.shape_cast %116 : vector<1x1x32xf32> to vector<1x32xf32>
    %118 = vector.shape_cast %115 : vector<1x32xf32> to vector<1x1x32xf32>
    tpu.vector_store %arg7[%c0_175, %c0_176, %c0_177], %118 {strides = array<i32>} : memref<1x1x32xf32, #tpu.memory_space<vmem>>, vector<1x1x32xf32>,
    return
  }
  func.func @transform_0(%arg0: i32) -> (i32, i32, i32, i32) {
    %c0_i32 = arith.constant 0 : i32
    %c0_i32_0 = arith.constant 0 : i32
    %c0_i32_1 = arith.constant 0 : i32
    %c0_i32_2 = arith.constant 0 : i32
    return %arg0, %c0_i32, %c0_i32_0, %c0_i32_1 : i32, i32, i32, i32
  }
  func.func @transform_1(%arg0: i32) -> (i32, i32) {
    %c0_i32 = arith.constant 0 : i32
    %c0_i32_0 = arith.constant 0 : i32
    %c0_i32_1 = arith.constant 0 : i32
    return %c0_i32, %c0_i32_0 : i32, i32
  }
  func.func @transform_2(%arg0: i32) -> (i32, i32, i32) {
    %c0_i32 = arith.constant 0 : i32
    %c0_i32_0 = arith.constant 0 : i32
    %c0_i32_1 = arith.constant 0 : i32
    %c0_i32_2 = arith.constant 0 : i32
    return %c0_i32, %c0_i32_0, %c0_i32_1 : i32, i32, i32
  }
  func.func @transform_3(%arg0: i32) -> (i32, i32, i32) {
    %c0_i32 = arith.constant 0 : i32
    %c0_i32_0 = arith.constant 0 : i32
    %c0_i32_1 = arith.constant 0 : i32
    %c0_i32_2 = arith.constant 0 : i32
    return %c0_i32, %c0_i32_0, %c0_i32_1 : i32, i32, i32
  }
  func.func @transform_4(%arg0: i32) -> (i32, i32) {
    %c0_i32 = arith.constant 0 : i32
    %c0_i32_0 = arith.constant 0 : i32
    %c0_i32_1 = arith.constant 0 : i32
    return %c0_i32, %c0_i32_0 : i32, i32
  }
  func.func @transform_5(%arg0: i32) -> (i32, i32) {
    %c0_i32 = arith.constant 0 : i32
    %c0_i32_0 = arith.constant 0 : i32
    %c0_i32_1 = arith.constant 0 : i32
    return %c0_i32, %c0_i32_0 : i32, i32
  }
  func.func @transform_6(%arg0: i32) -> (i32, i32, i32) {
    %c0_i32 = arith.constant 0 : i32
    %c0_i32_0 = arith.constant 0 : i32
    %c0_i32_1 = arith.constant 0 : i32
    return %arg0, %c0_i32, %c0_i32_0 : i32, i32, i32
  }
}

</mosaic_0001>

<llo_original>
// kernel: tpu_custom_call.1
$region0: #{tpu_custom_call.1}
  #allocation0 [shape = 'u32[]', space=smem, size = 0x4, offset = 0x4, fixed_abs, tag = 'smem constant byte address 0x4 - core index']
  #allocation1 [shape = 'u32[144,128]{1,0:T(1,128)}', space=vmem, size = 0x12000, scoped, tag = 'internal scratch']
  #allocation2 [shape = 'f32[18,18,16]{2,1,0:T(8,128)}', space=vmem, size = 0x36000, scoped, tag = 'scratch operand']
  #allocation3 [shape = 'f32[10,10,32]{2,1,0:T(8,128)}', space=vmem, size = 0x14000, scoped, tag = 'scratch operand']
  #allocation4 [shape = 'f32[6,6,32]{2,1,0:T(8,128)}', space=vmem, size = 0x6000, scoped, tag = 'scratch operand']
  #allocation5 [shape = 'f32[4,4,32]{2,1,0:T(4,128)}', space=vmem, size = 0x2000, scoped, tag = 'scratch operand']
  %s0 = inlined_call_operand.vmem [shape: f32[2,16,16,16], index: 0, kind: input, shape index: {}]
  %s1 = inlined_call_operand.vmem [shape: bf16[144,32], index: 1, kind: input, shape index: {}]
  %s2 = inlined_call_operand.vmem [shape: bf16[3,288,32], index: 2, kind: input, shape index: {}]
  %s3 = inlined_call_operand.vmem [shape: f32[4,1,32], index: 3, kind: input, shape index: {}]
  %s4 = inlined_call_operand.vmem [shape: bf16[32,32], index: 4, kind: input, shape index: {}]
  %s5 = inlined_call_operand.vmem [shape: f32[1,32], index: 5, kind: input, shape index: {}]
  %s6 = inlined_call_operand.hbm [shape: f32[2,1,32], index: 6, kind: output, shape index: {}]
  %s7 = sld [smem:[#allocation0]]
  $region57: #{tpu_custom_call.1} parent=0
    _
  %s9 = ssub.s32 1, %s7
  %s10 = scalar_select 0, %s9, %s7
  $region1: #{tpu_custom_call.1} parent=0
    #allocation6 [shape = 'u8[1024]{0}', space=vmem, size = 0x400, scoped, tag = 'output window, operand 0']
    #allocation7 [shape = 's32[2]{0}', space=sflag, size = 0x8, scoped, tag = 'scoped memory for tpu_custom_call.1']
    %11 = vsyncpa [#allocation7], 0
    %s12 = scalar_lea.sflag [#allocation7], 1
    %13 = vsyncpa %s12, 0
    loop: start=0, step=1, limit=4
    $region2: #{tpu_custom_call.1} parent=1 // loop_pre_header
      _
    $region3: #{tpu_custom_call.1} parent=1 // loop_header
      %s15 = sphi 0, %s19
      %p16 = scmp.ge.s32.totalorder %s15, 4
      %s25 = sphi 0, %s27
      %s28 = sphi 0, %s25
      %s29 = sphi 0, %s28
      %s45 = sphi 0, %s29
      %s49 = sphi 0, %s49
      %s51 = sphi 0, %s49
      %s52 = sphi 0, %s51
      %s66 = sphi 0, %s52
      %s70 = sphi 0, %s70
      %s72 = sphi 0, %s70
      %s73 = sphi 0, %s72
      %s87 = sphi 0, %s73
      %s91 = sphi 0, %s91
      %s93 = sphi 0, %s91
      %s94 = sphi 0, %s93
      %s108 = sphi 0, %s94
      %s112 = sphi 0, %s112
      %s114 = sphi 0, %s112
      %s115 = sphi 0, %s114
      %s129 = sphi 0, %s115
      %s133 = sphi 0, %s133
      %s135 = sphi 0, %s133
      %s136 = sphi 0, %s135
      %s150 = sphi 0, %s136
      %s156 = sphi 0, %s158
      %s159 = sphi 0, %s156
      %s160 = sphi 0, %s159
      %s176 = sphi 0, %s160
    $region4: #{tpu_custom_call.1} parent=1 // loop_header_branch
      %18 = sbr.rel (%p16) target = $region8
    $region5: #{tpu_custom_call.1} parent=1 // loop_body
      %s20 = ssub.s32 %s15, 1
      %s21 = ssub.s32 %s15, 2
      %s22 = sadd.s32 %s15, 1
      %s23 = ssub.s32 %s15, %s22
      %p24 = scmp.eq.s32.totalorder %s23, 0
      %s26 = sadd.s32 %s25, 1
      %s27 = scalar_select %p24, %s25, %s26
      %p30 = pneg %p24
      %p31 = scmp.eq.s32.totalorder %s15, 1
      %p32 = por %p30, %p31
      %p33 = scmp.ne.s32.totalorder %s25, %s28
      %p34 = scmp.eq.s32.totalorder %s15, 0
      %p35 = por %p33, %p34
      %p36 = scmp.ne.s32.totalorder %s25, %s28
      %p37 = scmp.eq.s32.totalorder %s20, 1
      %p38 = por %p36, %p37
      %p39 = scmp.ne.s32.totalorder %s28, %s29
      %p40 = scmp.eq.s32.totalorder %s20, 0
      %p41 = por %p39, %p40
      %p42 = scmp.ne.s32.totalorder %s28, %s29
      %p43 = scmp.eq.s32.totalorder %s21, 1
      %p44 = por %p42, %p43
      %p46 = scmp.ne.s32.totalorder %s29, %s45
      %p47 = scmp.eq.s32.totalorder %s21, 0
      %p48 = por %p46, %p47
      %s50 = sadd.s32 %s49, 1
      %p53 = scmp.eq.s32.totalorder %s15, 1
      %p54 = scmp.ne.s32.totalorder %s49, %s51
      %p55 = scmp.eq.s32.totalorder %s15, 0
      %p56 = por %p54, %p55
      %p57 = scmp.ne.s32.totalorder %s49, %s51
      %p58 = scmp.eq.s32.totalorder %s20, 1
      %p59 = por %p57, %p58
      %p60 = scmp.ne.s32.totalorder %s51, %s52
      %p61 = scmp.eq.s32.totalorder %s20, 0
      %p62 = por %p60, %p61
      %p63 = scmp.ne.s32.totalorder %s51, %s52
      %p64 = scmp.eq.s32.totalorder %s21, 1
      %p65 = por %p63, %p64
      %p67 = scmp.ne.s32.totalorder %s52, %s66
      %p68 = scmp.eq.s32.totalorder %s21, 0
      %p69 = por %p67, %p68
      %s71 = sadd.s32 %s70, 1
      %p74 = scmp.eq.s32.totalorder %s15, 1
      %p75 = scmp.ne.s32.totalorder %s70, %s72
      %p76 = scmp.eq.s32.totalorder %s15, 0
      %p77 = por %p75, %p76
      %p78 = scmp.ne.s32.totalorder %s70, %s72
      %p79 = scmp.eq.s32.totalorder %s20, 1
      %p80 = por %p78, %p79
      %p81 = scmp.ne.s32.totalorder %s72, %s73
      %p82 = scmp.eq.s32.totalorder %s20, 0
      %p83 = por %p81, %p82
      %p84 = scmp.ne.s32.totalorder %s72, %s73
      %p85 = scmp.eq.s32.totalorder %s21, 1
      %p86 = por %p84, %p85
      %p88 = scmp.ne.s32.totalorder %s73, %s87
      %p89 = scmp.eq.s32.totalorder %s21, 0
      %p90 = por %p88, %p89
      %s92 = sadd.s32 %s91, 1
      %p95 = scmp.eq.s32.totalorder %s15, 1
      %p96 = scmp.ne.s32.totalorder %s91, %s93
      %p97 = scmp.eq.s32.totalorder %s15, 0
      %p98 = por %p96, %p97
      %p99 = scmp.ne.s32.totalorder %s91, %s93
      %p100 = scmp.eq.s32.totalorder %s20, 1
      %p101 = por %p99, %p100
      %p102 = scmp.ne.s32.totalorder %s93, %s94
      %p103 = scmp.eq.s32.totalorder %s20, 0
      %p104 = por %p102, %p103
      %p105 = scmp.ne.s32.totalorder %s93, %s94
      %p106 = scmp.eq.s32.totalorder %s21, 1
      %p107 = por %p105, %p106
      %p109 = scmp.ne.s32.totalorder %s94, %s108
      %p110 = scmp.eq.s32.totalorder %s21, 0
      %p111 = por %p109, %p110
      %s113 = sadd.s32 %s112, 1
      %p116 = scmp.eq.s32.totalorder %s15, 1
      %p117 = scmp.ne.s32.totalorder %s112, %s114
      %p118 = scmp.eq.s32.totalorder %s15, 0
      %p119 = por %p117, %p118
      %p120 = scmp.ne.s32.totalorder %s112, %s114
      %p121 = scmp.eq.s32.totalorder %s20, 1
      %p122 = por %p120, %p121
      %p123 = scmp.ne.s32.totalorder %s114, %s115
      %p124 = scmp.eq.s32.totalorder %s20, 0
      %p125 = por %p123, %p124
      %p126 = scmp.ne.s32.totalorder %s114, %s115
      %p127 = scmp.eq.s32.totalorder %s21, 1
      %p128 = por %p126, %p127
      %p130 = scmp.ne.s32.totalorder %s115, %s129
      %p131 = scmp.eq.s32.totalorder %s21, 0
      %p132 = por %p130, %p131
      %s134 = sadd.s32 %s133, 1
      %p137 = scmp.eq.s32.totalorder %s15, 1
      %p138 = scmp.ne.s32.totalorder %s133, %s135
      %p139 = scmp.eq.s32.totalorder %s15, 0
      %p140 = por %p138, %p139
      %p141 = scmp.ne.s32.totalorder %s133, %s135
      %p142 = scmp.eq.s32.totalorder %s20, 1
      %p143 = por %p141, %p142
      %p144 = scmp.ne.s32.totalorder %s135, %s136
      %p145 = scmp.eq.s32.totalorder %s20, 0
      %p146 = por %p144, %p145
      %p147 = scmp.ne.s32.totalorder %s135, %s136
      %p148 = scmp.eq.s32.totalorder %s21, 1
      %p149 = por %p147, %p148
      %p151 = scmp.ne.s32.totalorder %s136, %s150
      %p152 = scmp.eq.s32.totalorder %s21, 0
      %p153 = por %p151, %p152
      %s154 = ssub.s32 %s15, %s22
      %p155 = scmp.eq.s32.totalorder %s154, 0
      %s157 = sadd.s32 %s156, 1
      %s158 = scalar_select %p155, %s156, %s157
      %p161 = pneg %p155
      %p162 = scmp.eq.s32.totalorder %s15, 1
      %p163 = por %p161, %p162
      %p164 = scmp.ne.s32.totalorder %s156, %s159
      %p165 = scmp.eq.s32.totalorder %s15, 0
      %p166 = por %p164, %p165
      %p167 = scmp.ne.s32.totalorder %s156, %s159
      %p168 = scmp.eq.s32.totalorder %s20, 1
      %p169 = por %p167, %p168
      %p170 = scmp.ne.s32.totalorder %s159, %s160
      %p171 = scmp.eq.s32.totalorder %s20, 0
      %p172 = por %p170, %p171
      %p173 = scmp.ne.s32.totalorder %s159, %s160
      %p174 = scmp.eq.s32.totalorder %s21, 1
      %p175 = por %p173, %p174
      %p177 = scmp.ne.s32.totalorder %s160, %s176
      %p178 = scmp.eq.s32.totalorder %s21, 0
      %p179 = por %p177, %p178
      %p180 = scmp.le.s32.totalorder 1, %s15
      %p181 = scmp.lt.s32.totalorder %s15, 3
      %p182 = pnand %p180, %p181
      %p183 = pneg %p182
      // Predicated region
      $region9: #{tpu_custom_call.1} parent=5 // pred_check
        _
      $region10: #{tpu_custom_call.1} parent=5 // pred_check_branch
        %185 = sbr.rel (%p182) target = $region12
      $region11: #{tpu_custom_call.1} parent=5 // pred_region
        %s186 = ssub.s32 %s15, 1
        // Predicated region
        $region13: #{tpu_custom_call.1} parent=11 // pred_check
          %p187 = pneg %p62
        $region14: #{tpu_custom_call.1} parent=11 // pred_check_branch
          %189 = sbr.rel (%p187) target = $region16
        $region15: #{tpu_custom_call.1} parent=11 // pred_region
          _
        $region16: #{tpu_custom_call.1} parent=11 // pred_fallthru
          _
        // Predicated region
        $region17: #{tpu_custom_call.1} parent=11 // pred_check
          %p190 = pneg %p83
        $region18: #{tpu_custom_call.1} parent=11 // pred_check_branch
          %192 = sbr.rel (%p190) target = $region20
        $region19: #{tpu_custom_call.1} parent=11 // pred_region
          _
        $region20: #{tpu_custom_call.1} parent=11 // pred_fallthru
          _
        // Predicated region
        $region21: #{tpu_custom_call.1} parent=11 // pred_check
          %p193 = pneg %p104
        $region22: #{tpu_custom_call.1} parent=11 // pred_check_branch
          %195 = sbr.rel (%p193) target = $region24
        $region23: #{tpu_custom_call.1} parent=11 // pred_region
          _
        $region24: #{tpu_custom_call.1} parent=11 // pred_fallthru
          _
        // Predicated region
        $region25: #{tpu_custom_call.1} parent=11 // pred_check
          %p196 = pneg %p125
        $region26: #{tpu_custom_call.1} parent=11 // pred_check_branch
          %198 = sbr.rel (%p196) target = $region28
        $region27: #{tpu_custom_call.1} parent=11 // pred_region
          _
        $region28: #{tpu_custom_call.1} parent=11 // pred_fallthru
          _
        // Predicated region
        $region29: #{tpu_custom_call.1} parent=11 // pred_check
          %p199 = pneg %p146
        $region30: #{tpu_custom_call.1} parent=11 // pred_check_branch
          %201 = sbr.rel (%p199) target = $region32
        $region31: #{tpu_custom_call.1} parent=11 // pred_region
          _
        $region32: #{tpu_custom_call.1} parent=11 // pred_fallthru
          _
      $region12: #{tpu_custom_call.1} parent=5 // pred_fallthru
        _
      %p202 = scmp.lt.s32.totalorder %s15, 2
      // Predicated region
      $region33: #{tpu_custom_call.1} parent=5 // pred_check
        %p203 = pneg %p202
      $region34: #{tpu_custom_call.1} parent=5 // pred_check_branch
        %205 = sbr.rel (%p203) target = $region36
      $region35: #{tpu_custom_call.1} parent=5 // pred_region
        // Predicated region
        $region37: #{tpu_custom_call.1} parent=35 // pred_check
          %p206 = pneg %p35
        $region38: #{tpu_custom_call.1} parent=35 // pred_check_branch
          %208 = sbr.rel (%p206) target = $region40
        $region39: #{tpu_custom_call.1} parent=35 // pred_region
          %p209 = scmp.lt.s32.totalorder %s15, 1
          %s210 = scalar_select %p209, %s15, 1
          %s211 = smul.addr %s210, 32
          %s212 = smul.addr %s211, 8
          %s213 = scalar_lea.vmem %s0, %s212
        $region40: #{tpu_custom_call.1} parent=35 // pred_fallthru
          _
      $region36: #{tpu_custom_call.1} parent=5 // pred_fallthru
        _
      %p214 = scmp.le.s32.totalorder 1, %s15
      %p215 = scmp.lt.s32.totalorder %s15, 3
      %p216 = pnand %p214, %p215
      %p217 = pneg %p216
      // Predicated region
      $region41: #{tpu_custom_call.1} parent=5 // pred_check
        _
      $region42: #{tpu_custom_call.1} parent=5 // pred_check_branch
        %219 = sbr.rel (%p216) target = $region44
      $region43: #{tpu_custom_call.1} parent=5 // pred_region
        %s220 = ssub.s32 %s15, 1
        %p221 = scmp.lt.s32.totalorder %s20, 1
        %s222 = scalar_select %p221, %s20, 1
        %s223 = smul.addr %s222, 32
        %s224 = smul.addr %s223, 8
        %s225 = scalar_lea.vmem %s0, %s224
        %p226 = pneg %p41
        %p227 = pneg %p38
        %p228 = pneg %p62
        %p229 = pneg %p59
        %p230 = pneg %p83
        %p231 = pneg %p80
        %p232 = pneg %p104
        %p233 = pneg %p101
        %p234 = pneg %p125
        %p235 = pneg %p122
        %p236 = pneg %p146
        %p237 = pneg %p143
        %p238 = pneg %p172
        %p239 = pneg %p169
        %s240 = sand.u32 %s159, 1
        %s241 = scalar_lea.sflag [#allocation7], %s240
        %s242 = sand.u32 %s159, 1
        %s243 = scalar_lea.vmem [#allocation6], %s242
        %p244 = scmp.lt.s32.totalorder %s20, 1
        %s245 = scalar_select %p244, %s20, 1
        %s246 = smul.addr %s245, 32
        %s247 = smul.addr %s246, 8
        %s248 = scalar_lea.vmem %s0, %s247
        %vm250 = vcmask 130048
        %251 = vst.msk [vmem:[#allocation2] sm:$0xff] %vm250, 0.0
        %252 = vst.msk [vmem:[#allocation2 + $0x8] sm:$0xff] %vm250, 0.0
        %vm253 = vcmask 123904
        %254 = vst.msk [vmem:[#allocation2 + $0x10] sm:$0x3] %vm253, 0.0
        %255 = vst.msk [vmem:[#allocation2 + $0x18] sm:$0xff] %vm250, 0.0
        %256 = vst.msk [vmem:[#allocation2 + $0x20] sm:$0xff] %vm250, 0.0
        %257 = vst.msk [vmem:[#allocation2 + $0x28] sm:$0x3] %vm253, 0.0
        %258 = vst.msk [vmem:[#allocation2 + $0x30] sm:$0xff] %vm250, 0.0
        %259 = vst.msk [vmem:[#allocation2 + $0x38] sm:$0xff] %vm250, 0.0
        %260 = vst.msk [vmem:[#allocation2 + $0x40] sm:$0x3] %vm253, 0.0
        %261 = vst.msk [vmem:[#allocation2 + $0x48] sm:$0xff] %vm250, 0.0
        %262 = vst.msk [vmem:[#allocation2 + $0x50] sm:$0xff] %vm250, 0.0
        %263 = vst.msk [vmem:[#allocation2 + $0x58] sm:$0x3] %vm253, 0.0
        %264 = vst.msk [vmem:[#allocation2 + $0x60] sm:$0xff] %vm250, 0.0
        %265 = vst.msk [vmem:[#allocation2 + $0x68] sm:$0xff] %vm250, 0.0
        %266 = vst.msk [vmem:[#allocation2 + $0x70] sm:$0x3] %vm253, 0.0
        %267 = vst.msk [vmem:[#allocation2 + $0x78] sm:$0xff] %vm250, 0.0
        %268 = vst.msk [vmem:[#allocation2 + $0x80] sm:$0xff] %vm250, 0.0
        %269 = vst.msk [vmem:[#allocation2 + $0x88] sm:$0x3] %vm253, 0.0
        %270 = vst.msk [vmem:[#allocation2 + $0x90] sm:$0xff] %vm250, 0.0
        %271 = vst.msk [vmem:[#allocation2 + $0x98] sm:$0xff] %vm250, 0.0
        %272 = vst.msk [vmem:[#allocation2 + $0xa0] sm:$0x3] %vm253, 0.0
        %273 = vst.msk [vmem:[#allocation2 + $0xa8] sm:$0xff] %vm250, 0.0
        %274 = vst.msk [vmem:[#allocation2 + $0xb0] sm:$0xff] %vm250, 0.0
        %275 = vst.msk [vmem:[#allocation2 + $0xb8] sm:$0x3] %vm253, 0.0
        %276 = vst.msk [vmem:[#allocation2 + $0xc0] sm:$0xff] %vm250, 0.0
        %277 = vst.msk [vmem:[#allocation2 + $0xc8] sm:$0xff] %vm250, 0.0
        %278 = vst.msk [vmem:[#allocation2 + $0xd0] sm:$0x3] %vm253, 0.0
        %279 = vst.msk [vmem:[#allocation2 + $0xd8] sm:$0xff] %vm250, 0.0
        %280 = vst.msk [vmem:[#allocation2 + $0xe0] sm:$0xff] %vm250, 0.0
        %281 = vst.msk [vmem:[#allocation2 + $0xe8] sm:$0x3] %vm253, 0.0
        %282 = vst.msk [vmem:[#allocation2 + $0xf0] sm:$0xff] %vm250, 0.0
        %283 = vst.msk [vmem:[#allocation2 + $0xf8] sm:$0xff] %vm250, 0.0
        %284 = vst.msk [vmem:[#allocation2 + $0x100] sm:$0x3] %vm253, 0.0
        %285 = vst.msk [vmem:[#allocation2 + $0x108] sm:$0xff] %vm250, 0.0
        %286 = vst.msk [vmem:[#allocation2 + $0x110] sm:$0xff] %vm250, 0.0
        %287 = vst.msk [vmem:[#allocation2 + $0x118] sm:$0x3] %vm253, 0.0
        %288 = vst.msk [vmem:[#allocation2 + $0x120] sm:$0xff] %vm250, 0.0
        %289 = vst.msk [vmem:[#allocation2 + $0x128] sm:$0xff] %vm250, 0.0
        %290 = vst.msk [vmem:[#allocation2 + $0x130] sm:$0x3] %vm253, 0.0
        %291 = vst.msk [vmem:[#allocation2 + $0x138] sm:$0xff] %vm250, 0.0
        %292 = vst.msk [vmem:[#allocation2 + $0x140] sm:$0xff] %vm250, 0.0
        %293 = vst.msk [vmem:[#allocation2 + $0x148] sm:$0x3] %vm253, 0.0
        %294 = vst.msk [vmem:[#allocation2 + $0x150] sm:$0xff] %vm250, 0.0
        %295 = vst.msk [vmem:[#allocation2 + $0x158] sm:$0xff] %vm250, 0.0
        %296 = vst.msk [vmem:[#allocation2 + $0x160] sm:$0x3] %vm253, 0.0
        %297 = vst.msk [vmem:[#allocation2 + $0x168] sm:$0xff] %vm250, 0.0
        %298 = vst.msk [vmem:[#allocation2 + $0x170] sm:$0xff] %vm250, 0.0
        %299 = vst.msk [vmem:[#allocation2 + $0x178] sm:$0x3] %vm253, 0.0
        %300 = vst.msk [vmem:[#allocation2 + $0x180] sm:$0xff] %vm250, 0.0
        %301 = vst.msk [vmem:[#allocation2 + $0x188] sm:$0xff] %vm250, 0.0
        %302 = vst.msk [vmem:[#allocation2 + $0x190] sm:$0x3] %vm253, 0.0
        %303 = vst.msk [vmem:[#allocation2 + $0x198] sm:$0xff] %vm250, 0.0
        %304 = vst.msk [vmem:[#allocation2 + $0x1a0] sm:$0xff] %vm250, 0.0
        %305 = vst.msk [vmem:[#allocation2 + $0x1a8] sm:$0x3] %vm253, 0.0
        %v306 = vld [vmem:[%s248] sm:$0xff]
        %v307 = vld [vmem:[%s248 + $0x8] sm:$0xff]
        %v308 = vld [vmem:[%s248 + $0x10] sm:$0xff]
        %v309 = vld [vmem:[%s248 + $0x18] sm:$0xff]
        %v310 = vld [vmem:[%s248 + $0x20] sm:$0xff]
        %v311 = vld [vmem:[%s248 + $0x28] sm:$0xff]
        %v312 = vld [vmem:[%s248 + $0x30] sm:$0xff]
        %v313 = vld [vmem:[%s248 + $0x38] sm:$0xff]
        %v314 = vld [vmem:[%s248 + $0x40] sm:$0xff]
        %v315 = vld [vmem:[%s248 + $0x48] sm:$0xff]
        %v316 = vld [vmem:[%s248 + $0x50] sm:$0xff]
        %v317 = vld [vmem:[%s248 + $0x58] sm:$0xff]
        %v318 = vld [vmem:[%s248 + $0x60] sm:$0xff]
        %v319 = vld [vmem:[%s248 + $0x68] sm:$0xff]
        %v320 = vld [vmem:[%s248 + $0x70] sm:$0xff]
        %v321 = vld [vmem:[%s248 + $0x78] sm:$0xff]
        %v322 = vld [vmem:[%s248 + $0x80] sm:$0xff]
        %v323 = vld [vmem:[%s248 + $0x88] sm:$0xff]
        %v324 = vld [vmem:[%s248 + $0x90] sm:$0xff]
        %v325 = vld [vmem:[%s248 + $0x98] sm:$0xff]
        %v326 = vld [vmem:[%s248 + $0xa0] sm:$0xff]
        %v327 = vld [vmem:[%s248 + $0xa8] sm:$0xff]
        %v328 = vld [vmem:[%s248 + $0xb0] sm:$0xff]
        %v329 = vld [vmem:[%s248 + $0xb8] sm:$0xff]
        %v330 = vld [vmem:[%s248 + $0xc0] sm:$0xff]
        %v331 = vld [vmem:[%s248 + $0xc8] sm:$0xff]
        %v332 = vld [vmem:[%s248 + $0xd0] sm:$0xff]
        %v333 = vld [vmem:[%s248 + $0xd8] sm:$0xff]
        %v334 = vld [vmem:[%s248 + $0xe0] sm:$0xff]
        %v335 = vld [vmem:[%s248 + $0xe8] sm:$0xff]
        %v336 = vld [vmem:[%s248 + $0xf0] sm:$0xff]
        %v337 = vld [vmem:[%s248 + $0xf8] sm:$0xff]
        %s338 = scalar_lea.vmem [#allocation2], 24
        %339 = vst.msk [vmem:[%s338 + $0x1] sm:$0xff] %vm250, %v306
        %340 = vst.msk [vmem:[%s338 + $0x9] sm:$0xff] %vm250, %v307
        %341 = vst.msk [vmem:[%s338 + $0x19] sm:$0xff] %vm250, %v308
        %342 = vst.msk [vmem:[%s338 + $0x21] sm:$0xff] %vm250, %v309
        %343 = vst.msk [vmem:[%s338 + $0x31] sm:$0xff] %vm250, %v310
        %344 = vst.msk [vmem:[%s338 + $0x39] sm:$0xff] %vm250, %v311
        %345 = vst.msk [vmem:[%s338 + $0x49] sm:$0xff] %vm250, %v312
        %346 = vst.msk [vmem:[%s338 + $0x51] sm:$0xff] %vm250, %v313
        %347 = vst.msk [vmem:[%s338 + $0x61] sm:$0xff] %vm250, %v314
        %348 = vst.msk [vmem:[%s338 + $0x69] sm:$0xff] %vm250, %v315
        %349 = vst.msk [vmem:[%s338 + $0x79] sm:$0xff] %vm250, %v316
        %350 = vst.msk [vmem:[%s338 + $0x81] sm:$0xff] %vm250, %v317
        %351 = vst.msk [vmem:[%s338 + $0x91] sm:$0xff] %vm250, %v318
        %352 = vst.msk [vmem:[%s338 + $0x99] sm:$0xff] %vm250, %v319
        %353 = vst.msk [vmem:[%s338 + $0xa9] sm:$0xff] %vm250, %v320
        %354 = vst.msk [vmem:[%s338 + $0xb1] sm:$0xff] %vm250, %v321
        %355 = vst.msk [vmem:[%s338 + $0xc1] sm:$0xff] %vm250, %v322
        %356 = vst.msk [vmem:[%s338 + $0xc9] sm:$0xff] %vm250, %v323
        %357 = vst.msk [vmem:[%s338 + $0xd9] sm:$0xff] %vm250, %v324
        %358 = vst.msk [vmem:[%s338 + $0xe1] sm:$0xff] %vm250, %v325
        %359 = vst.msk [vmem:[%s338 + $0xf1] sm:$0xff] %vm250, %v326
        %360 = vst.msk [vmem:[%s338 + $0xf9] sm:$0xff] %vm250, %v327
        %361 = vst.msk [vmem:[%s338 + $0x109] sm:$0xff] %vm250, %v328
        %362 = vst.msk [vmem:[%s338 + $0x111] sm:$0xff] %vm250, %v329
        %363 = vst.msk [vmem:[%s338 + $0x121] sm:$0xff] %vm250, %v330
        %364 = vst.msk [vmem:[%s338 + $0x129] sm:$0xff] %vm250, %v331
        %365 = vst.msk [vmem:[%s338 + $0x139] sm:$0xff] %vm250, %v332
        %366 = vst.msk [vmem:[%s338 + $0x141] sm:$0xff] %vm250, %v333
        %367 = vst.msk [vmem:[%s338 + $0x151] sm:$0xff] %vm250, %v334
        %368 = vst.msk [vmem:[%s338 + $0x159] sm:$0xff] %vm250, %v335
        %369 = vst.msk [vmem:[%s338 + $0x169] sm:$0xff] %vm250, %v336
        %370 = vst.msk [vmem:[%s338 + $0x171] sm:$0xff] %vm250, %v337
        %v371 = vld [vmem:[#allocation2] ss:$2 sm:$0xff]
        %s372 = scalar_lea.vmem [#allocation2], 48
        %v373 = vld [vmem:[%s372] ss:$2 sm:$0xff]
        %s374 = scalar_lea.vmem [#allocation2], 96
        %v375 = vld [vmem:[%s374] ss:$2 sm:$0xff]
        %s376 = scalar_lea.vmem [#allocation2], 144
        %v377 = vld [vmem:[%s376] ss:$2 sm:$0xff]
        %s378 = scalar_lea.vmem [#allocation2], 192
        %v379 = vld [vmem:[%s378] ss:$2 sm:$0xff]
        %s380 = scalar_lea.vmem [#allocation2], 240
        %v381 = vld [vmem:[%s380] ss:$2 sm:$0xff]
        %s382 = scalar_lea.vmem [#allocation2], 288
        %v383 = vld [vmem:[%s382] ss:$2 sm:$0xff]
        %s384 = scalar_lea.vmem [#allocation2], 336
        %v385 = vld [vmem:[%s384] ss:$2 sm:$0xff]
        %s386 = scalar_lea.vmem [#allocation2], 1
        %v387 = vld [vmem:[%s386] ss:$2 sm:$0xff]
        %s388 = scalar_lea.vmem [#allocation2], 49
        %v389 = vld [vmem:[%s388] ss:$2 sm:$0xff]
        %s390 = scalar_lea.vmem [#allocation2], 97
        %v391 = vld [vmem:[%s390] ss:$2 sm:$0xff]
        %s392 = scalar_lea.vmem [#allocation2], 145
        %v393 = vld [vmem:[%s392] ss:$2 sm:$0xff]
        %s394 = scalar_lea.vmem [#allocation2], 193
        %v395 = vld [vmem:[%s394] ss:$2 sm:$0xff]
        %s396 = scalar_lea.vmem [#allocation2], 241
        %v397 = vld [vmem:[%s396] ss:$2 sm:$0xff]
        %s398 = scalar_lea.vmem [#allocation2], 289
        %v399 = vld [vmem:[%s398] ss:$2 sm:$0xff]
        %s400 = scalar_lea.vmem [#allocation2], 337
        %v401 = vld [vmem:[%s400] ss:$2 sm:$0xff]
        %s402 = scalar_lea.vmem [#allocation2], 2
        %v403 = vld [vmem:[%s402] ss:$2 sm:$0xff]
        %s404 = scalar_lea.vmem [#allocation2], 50
        %v405 = vld [vmem:[%s404] ss:$2 sm:$0xff]
        %s406 = scalar_lea.vmem [#allocation2], 98
        %v407 = vld [vmem:[%s406] ss:$2 sm:$0xff]
        %s408 = scalar_lea.vmem [#allocation2], 146
        %v409 = vld [vmem:[%s408] ss:$2 sm:$0xff]
        %s410 = scalar_lea.vmem [#allocation2], 194
        %v411 = vld [vmem:[%s410] ss:$2 sm:$0xff]
        %s412 = scalar_lea.vmem [#allocation2], 242
        %v413 = vld [vmem:[%s412] ss:$2 sm:$0xff]
        %s414 = scalar_lea.vmem [#allocation2], 290
        %v415 = vld [vmem:[%s414] ss:$2 sm:$0xff]
        %s416 = scalar_lea.vmem [#allocation2], 338
        %v417 = vld [vmem:[%s416] ss:$2 sm:$0xff]
        %v418 = vld [vmem:[%s338] ss:$2 sm:$0xff]
        %s419 = scalar_lea.vmem %s338, 48 [#allocation2]
        %v420 = vld [vmem:[%s419] ss:$2 sm:$0xff]
        %s421 = scalar_lea.vmem %s338, 96 [#allocation2]
        %v422 = vld [vmem:[%s421] ss:$2 sm:$0xff]
        %s423 = scalar_lea.vmem %s338, 144 [#allocation2]
        %v424 = vld [vmem:[%s423] ss:$2 sm:$0xff]
        %s425 = scalar_lea.vmem %s338, 192 [#allocation2]
        %v426 = vld [vmem:[%s425] ss:$2 sm:$0xff]
        %s427 = scalar_lea.vmem %s338, 240 [#allocation2]
        %v428 = vld [vmem:[%s427] ss:$2 sm:$0xff]
        %s429 = scalar_lea.vmem %s338, 288 [#allocation2]
        %v430 = vld [vmem:[%s429] ss:$2 sm:$0xff]
        %s431 = scalar_lea.vmem %s338, 336 [#allocation2]
        %v432 = vld [vmem:[%s431] ss:$2 sm:$0xff]
        %s433 = scalar_lea.vmem %s338, 1 [#allocation2]
        %v434 = vld [vmem:[%s433] ss:$2 sm:$0xff]
        %s435 = scalar_lea.vmem %s338, 49 [#allocation2]
        %v436 = vld [vmem:[%s435] ss:$2 sm:$0xff]
        %s437 = scalar_lea.vmem %s338, 97 [#allocation2]
        %v438 = vld [vmem:[%s437] ss:$2 sm:$0xff]
        %s439 = scalar_lea.vmem %s338, 145 [#allocation2]
        %v440 = vld [vmem:[%s439] ss:$2 sm:$0xff]
        %s441 = scalar_lea.vmem %s338, 193 [#allocation2]
        %v442 = vld [vmem:[%s441] ss:$2 sm:$0xff]
        %s443 = scalar_lea.vmem %s338, 241 [#allocation2]
        %v444 = vld [vmem:[%s443] ss:$2 sm:$0xff]
        %s445 = scalar_lea.vmem %s338, 289 [#allocation2]
        %v446 = vld [vmem:[%s445] ss:$2 sm:$0xff]
        %s447 = scalar_lea.vmem %s338, 337 [#allocation2]
        %v448 = vld [vmem:[%s447] ss:$2 sm:$0xff]
        %s449 = scalar_lea.vmem %s338, 2 [#allocation2]
        %v450 = vld [vmem:[%s449] ss:$2 sm:$0xff]
        %s451 = scalar_lea.vmem %s338, 50 [#allocation2]
        %v452 = vld [vmem:[%s451] ss:$2 sm:$0xff]
        %s453 = scalar_lea.vmem %s338, 98 [#allocation2]
        %v454 = vld [vmem:[%s453] ss:$2 sm:$0xff]
        %s455 = scalar_lea.vmem %s338, 146 [#allocation2]
        %v456 = vld [vmem:[%s455] ss:$2 sm:$0xff]
        %s457 = scalar_lea.vmem %s338, 194 [#allocation2]
        %v458 = vld [vmem:[%s457] ss:$2 sm:$0xff]
        %s459 = scalar_lea.vmem %s338, 242 [#allocation2]
        %v460 = vld [vmem:[%s459] ss:$2 sm:$0xff]
        %s461 = scalar_lea.vmem %s338, 290 [#allocation2]
        %v462 = vld [vmem:[%s461] ss:$2 sm:$0xff]
        %s463 = scalar_lea.vmem %s338, 338 [#allocation2]
        %v464 = vld [vmem:[%s463] ss:$2 sm:$0xff]
        %s465 = scalar_lea.vmem [#allocation2], 48
        %v466 = vld [vmem:[%s465] ss:$2 sm:$0xff]
        %s467 = scalar_lea.vmem %s465, 48 [#allocation2]
        %v468 = vld [vmem:[%s467] ss:$2 sm:$0xff]
        %s469 = scalar_lea.vmem %s465, 96 [#allocation2]
        %v470 = vld [vmem:[%s469] ss:$2 sm:$0xff]
        %s471 = scalar_lea.vmem %s465, 144 [#allocation2]
        %v472 = vld [vmem:[%s471] ss:$2 sm:$0xff]
        %s473 = scalar_lea.vmem %s465, 192 [#allocation2]
        %v474 = vld [vmem:[%s473] ss:$2 sm:$0xff]
        %s475 = scalar_lea.vmem %s465, 240 [#allocation2]
        %v476 = vld [vmem:[%s475] ss:$2 sm:$0xff]
        %s477 = scalar_lea.vmem %s465, 288 [#allocation2]
        %v478 = vld [vmem:[%s477] ss:$2 sm:$0xff]
        %s479 = scalar_lea.vmem %s465, 336 [#allocation2]
        %v480 = vld [vmem:[%s479] ss:$2 sm:$0xff]
        %s481 = scalar_lea.vmem %s465, 1 [#allocation2]
        %v482 = vld [vmem:[%s481] ss:$2 sm:$0xff]
        %s483 = scalar_lea.vmem %s465, 49 [#allocation2]
        %v484 = vld [vmem:[%s483] ss:$2 sm:$0xff]
        %s485 = scalar_lea.vmem %s465, 97 [#allocation2]
        %v486 = vld [vmem:[%s485] ss:$2 sm:$0xff]
        %s487 = scalar_lea.vmem %s465, 145 [#allocation2]
        %v488 = vld [vmem:[%s487] ss:$2 sm:$0xff]
        %s489 = scalar_lea.vmem %s465, 193 [#allocation2]
        %v490 = vld [vmem:[%s489] ss:$2 sm:$0xff]
        %s491 = scalar_lea.vmem %s465, 241 [#allocation2]
        %v492 = vld [vmem:[%s491] ss:$2 sm:$0xff]
        %s493 = scalar_lea.vmem %s465, 289 [#allocation2]
        %v494 = vld [vmem:[%s493] ss:$2 sm:$0xff]
        %s495 = scalar_lea.vmem %s465, 337 [#allocation2]
        %v496 = vld [vmem:[%s495] ss:$2 sm:$0xff]
        %s497 = scalar_lea.vmem %s465, 2 [#allocation2]
        %v498 = vld [vmem:[%s497] ss:$2 sm:$0xff]
        %s499 = scalar_lea.vmem %s465, 50 [#allocation2]
        %v500 = vld [vmem:[%s499] ss:$2 sm:$0xff]
        %s501 = scalar_lea.vmem %s465, 98 [#allocation2]
        %v502 = vld [vmem:[%s501] ss:$2 sm:$0xff]
        %s503 = scalar_lea.vmem %s465, 146 [#allocation2]
        %v504 = vld [vmem:[%s503] ss:$2 sm:$0xff]
        %s505 = scalar_lea.vmem %s465, 194 [#allocation2]
        %v506 = vld [vmem:[%s505] ss:$2 sm:$0xff]
        %s507 = scalar_lea.vmem %s465, 242 [#allocation2]
        %v508 = vld [vmem:[%s507] ss:$2 sm:$0xff]
        %s509 = scalar_lea.vmem %s465, 290 [#allocation2]
        %v510 = vld [vmem:[%s509] ss:$2 sm:$0xff]
        %s511 = scalar_lea.vmem %s465, 338 [#allocation2]
        %v512 = vld [vmem:[%s511] ss:$2 sm:$0xff]
        %521 = vrot.lane.b32.xlu0 %v387, 16
        %v522 = vpop.permute.xlu0 %521
        %523 = vrot.lane.b32.xlu0 %v389, 16
        %v524 = vpop.permute.xlu0 %523
        %525 = vrot.lane.b32.xlu0 %v391, 16
        %v526 = vpop.permute.xlu0 %525
        %527 = vrot.lane.b32.xlu0 %v393, 16
        %v528 = vpop.permute.xlu0 %527
        %529 = vrot.lane.b32.xlu0 %v395, 16
        %v530 = vpop.permute.xlu0 %529
        %531 = vrot.lane.b32.xlu0 %v397, 16
        %v532 = vpop.permute.xlu0 %531
        %533 = vrot.lane.b32.xlu0 %v399, 16
        %v534 = vpop.permute.xlu0 %533
        %535 = vrot.lane.b32.xlu0 %v401, 16
        %v536 = vpop.permute.xlu0 %535
        %553 = vrot.lane.b32.xlu0 %v403, 32
        %v554 = vpop.permute.xlu0 %553
        %555 = vrot.lane.b32.xlu0 %v405, 32
        %v556 = vpop.permute.xlu0 %555
        %557 = vrot.lane.b32.xlu0 %v407, 32
        %v558 = vpop.permute.xlu0 %557
        %559 = vrot.lane.b32.xlu0 %v409, 32
        %v560 = vpop.permute.xlu0 %559
        %561 = vrot.lane.b32.xlu0 %v411, 32
        %v562 = vpop.permute.xlu0 %561
        %563 = vrot.lane.b32.xlu0 %v413, 32
        %v564 = vpop.permute.xlu0 %563
        %565 = vrot.lane.b32.xlu0 %v415, 32
        %v566 = vpop.permute.xlu0 %565
        %567 = vrot.lane.b32.xlu0 %v417, 32
        %v568 = vpop.permute.xlu0 %567
        %585 = vrot.lane.b32.xlu0 %v418, 48
        %v586 = vpop.permute.xlu0 %585
        %587 = vrot.lane.b32.xlu0 %v420, 48
        %v588 = vpop.permute.xlu0 %587
        %589 = vrot.lane.b32.xlu0 %v422, 48
        %v590 = vpop.permute.xlu0 %589
        %591 = vrot.lane.b32.xlu0 %v424, 48
        %v592 = vpop.permute.xlu0 %591
        %593 = vrot.lane.b32.xlu0 %v426, 48
        %v594 = vpop.permute.xlu0 %593
        %595 = vrot.lane.b32.xlu0 %v428, 48
        %v596 = vpop.permute.xlu0 %595
        %597 = vrot.lane.b32.xlu0 %v430, 48
        %v598 = vpop.permute.xlu0 %597
        %599 = vrot.lane.b32.xlu0 %v432, 48
        %v600 = vpop.permute.xlu0 %599
        %617 = vrot.lane.b32.xlu0 %v434, 64
        %v618 = vpop.permute.xlu0 %617
        %619 = vrot.lane.b32.xlu0 %v436, 64
        %v620 = vpop.permute.xlu0 %619
        %621 = vrot.lane.b32.xlu0 %v438, 64
        %v622 = vpop.permute.xlu0 %621
        %623 = vrot.lane.b32.xlu0 %v440, 64
        %v624 = vpop.permute.xlu0 %623
        %625 = vrot.lane.b32.xlu0 %v442, 64
        %v626 = vpop.permute.xlu0 %625
        %627 = vrot.lane.b32.xlu0 %v444, 64
        %v628 = vpop.permute.xlu0 %627
        %629 = vrot.lane.b32.xlu0 %v446, 64
        %v630 = vpop.permute.xlu0 %629
        %631 = vrot.lane.b32.xlu0 %v448, 64
        %v632 = vpop.permute.xlu0 %631
        %649 = vrot.lane.b32.xlu0 %v450, 80
        %v650 = vpop.permute.xlu0 %649
        %651 = vrot.lane.b32.xlu0 %v452, 80
        %v652 = vpop.permute.xlu0 %651
        %653 = vrot.lane.b32.xlu0 %v454, 80
        %v654 = vpop.permute.xlu0 %653
        %655 = vrot.lane.b32.xlu0 %v456, 80
        %v656 = vpop.permute.xlu0 %655
        %657 = vrot.lane.b32.xlu0 %v458, 80
        %v658 = vpop.permute.xlu0 %657
        %659 = vrot.lane.b32.xlu0 %v460, 80
        %v660 = vpop.permute.xlu0 %659
        %661 = vrot.lane.b32.xlu0 %v462, 80
        %v662 = vpop.permute.xlu0 %661
        %663 = vrot.lane.b32.xlu0 %v464, 80
        %v664 = vpop.permute.xlu0 %663
        %681 = vrot.lane.b32.xlu0 %v466, 96
        %v682 = vpop.permute.xlu0 %681
        %683 = vrot.lane.b32.xlu0 %v468, 96
        %v684 = vpop.permute.xlu0 %683
        %685 = vrot.lane.b32.xlu0 %v470, 96
        %v686 = vpop.permute.xlu0 %685
        %687 = vrot.lane.b32.xlu0 %v472, 96
        %v688 = vpop.permute.xlu0 %687
        %689 = vrot.lane.b32.xlu0 %v474, 96
        %v690 = vpop.permute.xlu0 %689
        %691 = vrot.lane.b32.xlu0 %v476, 96
        %v692 = vpop.permute.xlu0 %691
        %693 = vrot.lane.b32.xlu0 %v478, 96
        %v694 = vpop.permute.xlu0 %693
        %695 = vrot.lane.b32.xlu0 %v480, 96
        %v696 = vpop.permute.xlu0 %695
        %713 = vrot.lane.b32.xlu0 %v482, 112
        %v714 = vpop.permute.xlu0 %713
        %715 = vrot.lane.b32.xlu0 %v484, 112
        %v716 = vpop.permute.xlu0 %715
        %717 = vrot.lane.b32.xlu0 %v486, 112
        %v718 = vpop.permute.xlu0 %717
        %719 = vrot.lane.b32.xlu0 %v488, 112
        %v720 = vpop.permute.xlu0 %719
        %721 = vrot.lane.b32.xlu0 %v490, 112
        %v722 = vpop.permute.xlu0 %721
        %723 = vrot.lane.b32.xlu0 %v492, 112
        %v724 = vpop.permute.xlu0 %723
        %725 = vrot.lane.b32.xlu0 %v494, 112
        %v726 = vpop.permute.xlu0 %725
        %727 = vrot.lane.b32.xlu0 %v496, 112
        %v728 = vpop.permute.xlu0 %727
        %v737 = vsel %vm250, %v371, %v522
        %v738 = vsel %vm250, %v373, %v524
        %v739 = vsel %vm250, %v375, %v526
        %v740 = vsel %vm250, %v377, %v528
        %v741 = vsel %vm250, %v379, %v530
        %v742 = vsel %vm250, %v381, %v532
        %v743 = vsel %vm250, %v383, %v534
        %v744 = vsel %vm250, %v385, %v536
        %vm745 = vcmask 261120
        %v746 = vsel %vm745, %v737, %v554
        %v747 = vsel %vm745, %v738, %v556
        %v748 = vsel %vm745, %v739, %v558
        %v749 = vsel %vm745, %v740, %v560
        %v750 = vsel %vm745, %v741, %v562
        %v751 = vsel %vm745, %v742, %v564
        %v752 = vsel %vm745, %v743, %v566
        %v753 = vsel %vm745, %v744, %v568
        %vm754 = vcmask 392192
        %v755 = vsel %vm754, %v746, %v586
        %v756 = vsel %vm754, %v747, %v588
        %v757 = vsel %vm754, %v748, %v590
        %v758 = vsel %vm754, %v749, %v592
        %v759 = vsel %vm754, %v750, %v594
        %v760 = vsel %vm754, %v751, %v596
        %v761 = vsel %vm754, %v752, %v598
        %v762 = vsel %vm754, %v753, %v600
        %vm763 = vcmask 523264
        %v764 = vsel %vm763, %v755, %v618
        %v765 = vsel %vm763, %v756, %v620
        %v766 = vsel %vm763, %v757, %v622
        %v767 = vsel %vm763, %v758, %v624
        %v768 = vsel %vm763, %v759, %v626
        %v769 = vsel %vm763, %v760, %v628
        %v770 = vsel %vm763, %v761, %v630
        %v771 = vsel %vm763, %v762, %v632
        %vm772 = vcmask 654336
        %v773 = vsel %vm772, %v764, %v650
        %v774 = vsel %vm772, %v765, %v652
        %v775 = vsel %vm772, %v766, %v654
        %v776 = vsel %vm772, %v767, %v656
        %v777 = vsel %vm772, %v768, %v658
        %v778 = vsel %vm772, %v769, %v660
        %v779 = vsel %vm772, %v770, %v662
        %v780 = vsel %vm772, %v771, %v664
        %vm781 = vcmask 785408
        %v782 = vsel %vm781, %v773, %v682
        %v783 = vsel %vm781, %v774, %v684
        %v784 = vsel %vm781, %v775, %v686
        %v785 = vsel %vm781, %v776, %v688
        %v786 = vsel %vm781, %v777, %v690
        %v787 = vsel %vm781, %v778, %v692
        %v788 = vsel %vm781, %v779, %v694
        %v789 = vsel %vm781, %v780, %v696
        %vm790 = vcmask 916480
        %v791 = vsel %vm790, %v782, %v714
        %v792 = vsel %vm790, %v783, %v716
        %v793 = vsel %vm790, %v784, %v718
        %v794 = vsel %vm790, %v785, %v720
        %v795 = vsel %vm790, %v786, %v722
        %v796 = vsel %vm790, %v787, %v724
        %v797 = vsel %vm790, %v788, %v726
        %v798 = vsel %vm790, %v789, %v728
        %v799 = vpack.c.bf16 %v792, %v791
        %v800 = vpack.c.bf16 %v500, %v498
        %v801 = vpack.c.bf16 %v794, %v793
        %v802 = vpack.c.bf16 %v504, %v502
        %v803 = vpack.c.bf16 %v796, %v795
        %v804 = vpack.c.bf16 %v508, %v506
        %v805 = vpack.c.bf16 %v798, %v797
        %v806 = vpack.c.bf16 %v512, %v510
        %v807 = vld [vmem:[%s1] sm:$0xf]
        %v808 = vld [vmem:[%s1 + $0x4] sm:$0xf]
        %v809 = vld [vmem:[%s1 + $0x8] sm:$0xf]
        %v810 = vld [vmem:[%s1 + $0xc] sm:$0xf]
        %v811 = vld [vmem:[%s1 + $0x10] sm:$0xf]
        %v812 = vld [vmem:[%s1 + $0x14] sm:$0xf]
        %v813 = vld [vmem:[%s1 + $0x18] sm:$0xf]
        %v814 = vld [vmem:[%s1 + $0x1c] sm:$0xf]
        %v815 = vld [vmem:[%s1 + $0x20] sm:$0xf]
        %v816 = vld [vmem:[%s1 + $0x24] sm:$0xf]
        %v817 = vld [vmem:[%s1 + $0x28] sm:$0xf]
        %v818 = vld [vmem:[%s1 + $0x2c] sm:$0xf]
        %v819 = vld [vmem:[%s1 + $0x30] sm:$0xf]
        %v820 = vld [vmem:[%s1 + $0x34] sm:$0xf]
        %v821 = vld [vmem:[%s1 + $0x38] sm:$0xf]
        %v822 = vld [vmem:[%s1 + $0x3c] sm:$0xf]
        %v823 = vld [vmem:[%s1 + $0x40] sm:$0xf]
        %v824 = vld [vmem:[%s1 + $0x44] sm:$0xf]
        %v825 = vld [vmem:[%s3] sm:$0x1]
        %v827 = vlaneseq
        %v828 = vshrl.u32 %v827, 7
        %v829 = vsub.s32 0, %v828
        %v830 = vrot.slane %v825, %v829
        %v850 = vunpack.c.l.b16 %v807
        %v851 = vunpack.c.l.b16 %v808
        %v852 = vunpack.c.l.b16 %v809
        %v853 = vunpack.c.l.b16 %v810
        %v854 = vunpack.c.l.b16 %v811
        %v855 = vunpack.c.l.b16 %v812
        %v856 = vunpack.c.l.b16 %v813
        %v857 = vunpack.c.l.b16 %v814
        %v858 = vunpack.c.l.b16 %v815
        %v859 = vunpack.c.l.b16 %v816
        %v860 = vunpack.c.l.b16 %v817
        %v861 = vunpack.c.l.b16 %v818
        %v862 = vunpack.c.l.b16 %v819
        %v863 = vunpack.c.l.b16 %v820
        %v864 = vunpack.c.l.b16 %v821
        %v865 = vunpack.c.l.b16 %v822
        %v866 = vunpack.c.l.b16 %v823
        %v867 = vunpack.c.l.b16 %v824
        %v868 = vpack.c.b16 %v851, %v850
        %v869 = vpack.c.b16 %v853, %v852
        %v870 = vpack.c.b16 %v855, %v854
        %v871 = vpack.c.b16 %v857, %v856
        %v872 = vpack.c.b16 %v859, %v858
        %v873 = vpack.c.b16 %v861, %v860
        %v874 = vpack.c.b16 %v863, %v862
        %v875 = vpack.c.b16 %v865, %v864
        %v876 = vpack.c.b16 %v867, %v866
        %v887 = vsel %vm250, %v800, 0
        %v890 = vsel %vm250, %v802, 0
        %v893 = vsel %vm250, %v804, 0
        %v896 = vsel %vm250, %v806, 0
        %898 = vmatprep.subr.bf16.mxu0 0
        %899 = vmatpush1.bf16.msra.mxu0 %v875
        %900 = vmatprep.subr.bf16.mxu0 0
        %901 = vmatpush1.bf16.msra.mxu0 %v874
        %902 = vmatprep.subr.bf16.mxu0 0
        %903 = vmatpush1.bf16.msra.mxu0 %v873
        %904 = vmatprep.subr.bf16.mxu0 0
        %905 = vmatpush1.bf16.msra.mxu0 %v872
        %906 = vmatprep.subr.bf16.mxu0 0
        %907 = vmatpush1.bf16.msra.mxu0 %v871
        %908 = vmatprep.subr.bf16.mxu0 0
        %909 = vmatpush1.bf16.msra.mxu0 %v870
        %910 = vmatprep.subr.bf16.mxu0 0
        %911 = vmatpush1.bf16.msra.mxu0 %v869
        %912 = vmatprep.subr.bf16.mxu0 0
        %913 = vmatpush1.bf16.msra.mxu0 %v868
        %914 = vmatprep.subr.bf16.mxu0 0
        %915 = vmatpush2.bf16.msra.mxu0 0
        %916 = vmatprep.subr.bf16.mxu0 0
        %917 = vmatpush2.bf16.msra.mxu0 0
        %918 = vmatprep.subr.bf16.mxu0 0
        %919 = vmatpush2.bf16.msra.mxu0 0
        %920 = vmatprep.subr.bf16.mxu0 0
        %921 = vmatpush2.bf16.msra.mxu0 0
        %922 = vmatprep.subr.bf16.mxu0 0
        %923 = vmatpush2.bf16.msra.mxu0 0
        %924 = vmatprep.subr.bf16.mxu0 0
        %925 = vmatpush2.bf16.msra.mxu0 0
        %926 = vmatprep.subr.bf16.mxu0 0
        %927 = vmatpush2.bf16.msra.mxu0 0
        %928 = vmatprep.subr.bf16.mxu0 0
        %929 = vmatpush2.bf16.msra.mxu0 %v876
        %930 = vmatprep.mubr.bf16.mxu0 %v887
        %931 = vmatmul.mubr.bf16.gmra.mxu0 %v799
        %v932 = vpop.f32.mrf.mxu0
        %v933 = vadd.f32 %v830, %v932
        %v934 = vpop.f32.mrf.mxu0
        %v935 = vpop.f32.mrf.mxu0
        %v936 = vadd.f32 %v830, %v935
        %v937 = vpop.f32.mrf.mxu0
        %938 = vmatprep.mubr.bf16.mxu0 %v890
        %939 = vmatmul.mubr.bf16.gmra.mxu0 %v801
        %v940 = vpop.f32.mrf.mxu0
        %v941 = vadd.f32 %v830, %v940
        %v942 = vpop.f32.mrf.mxu0
        %v943 = vpop.f32.mrf.mxu0
        %v944 = vadd.f32 %v830, %v943
        %v945 = vpop.f32.mrf.mxu0
        %946 = vmatprep.mubr.bf16.mxu0 %v893
        %947 = vmatmul.mubr.bf16.gmra.mxu0 %v803
        %v948 = vpop.f32.mrf.mxu0
        %v949 = vadd.f32 %v830, %v948
        %v950 = vpop.f32.mrf.mxu0
        %v951 = vpop.f32.mrf.mxu0
        %v952 = vadd.f32 %v830, %v951
        %v953 = vpop.f32.mrf.mxu0
        %954 = vmatprep.mubr.bf16.mxu0 %v896
        %955 = vmatmul.mubr.bf16.gmra.mxu0 %v805
        %v956 = vpop.f32.mrf.mxu0
        %v957 = vadd.f32 %v830, %v956
        %v958 = vpop.f32.mrf.mxu0
        %v959 = vpop.f32.mrf.mxu0
        %v960 = vadd.f32 %v830, %v959
        %v961 = vpop.f32.mrf.mxu0
        %962 = vdwg.mxu0
        %vm963 = vcmp.gt.f32.partialorder %v933, 0.0
        %vm964 = vcmp.gt.f32.partialorder %v936, 0.0
        %vm965 = vcmp.gt.f32.partialorder %v941, 0.0
        %vm966 = vcmp.gt.f32.partialorder %v944, 0.0
        %vm967 = vcmp.gt.f32.partialorder %v949, 0.0
        %vm968 = vcmp.gt.f32.partialorder %v952, 0.0
        %vm969 = vcmp.gt.f32.partialorder %v957, 0.0
        %vm970 = vcmp.gt.f32.partialorder %v960, 0.0
        %v971 = vmul.f32 %v933, 0.01
        %v972 = vmul.f32 %v936, 0.01
        %v973 = vmul.f32 %v941, 0.01
        %v974 = vmul.f32 %v944, 0.01
        %v975 = vmul.f32 %v949, 0.01
        %v976 = vmul.f32 %v952, 0.01
        %v977 = vmul.f32 %v957, 0.01
        %v978 = vmul.f32 %v960, 0.01
        %v979 = vsel %vm963, %v933, %v971
        %v980 = vsel %vm964, %v936, %v972
        %v981 = vsel %vm965, %v941, %v973
        %v982 = vsel %vm966, %v944, %v974
        %v983 = vsel %vm967, %v949, %v975
        %v984 = vsel %vm968, %v952, %v976
        %v985 = vsel %vm969, %v957, %v977
        %v986 = vsel %vm970, %v960, %v978
        %987 = vst.msk [vmem:[#allocation3] sm:$0xff] %vm745, 0.0
        %vm988 = vcmask 254976
        %989 = vst.msk [vmem:[#allocation3 + $0x8] sm:$0x3] %vm988, 0.0
        %990 = vst.msk [vmem:[#allocation3 + $0x10] sm:$0xff] %vm745, 0.0
        %991 = vst.msk [vmem:[#allocation3 + $0x18] sm:$0x3] %vm988, 0.0
        %992 = vst.msk [vmem:[#allocation3 + $0x20] sm:$0xff] %vm745, 0.0
        %993 = vst.msk [vmem:[#allocation3 + $0x28] sm:$0x3] %vm988, 0.0
        %994 = vst.msk [vmem:[#allocation3 + $0x30] sm:$0xff] %vm745, 0.0
        %995 = vst.msk [vmem:[#allocation3 + $0x38] sm:$0x3] %vm988, 0.0
        %996 = vst.msk [vmem:[#allocation3 + $0x40] sm:$0xff] %vm745, 0.0
        %997 = vst.msk [vmem:[#allocation3 + $0x48] sm:$0x3] %vm988, 0.0
        %998 = vst.msk [vmem:[#allocation3 + $0x50] sm:$0xff] %vm745, 0.0
        %999 = vst.msk [vmem:[#allocation3 + $0x58] sm:$0x3] %vm988, 0.0
        %1000 = vst.msk [vmem:[#allocation3 + $0x60] sm:$0xff] %vm745, 0.0
        %1001 = vst.msk [vmem:[#allocation3 + $0x68] sm:$0x3] %vm988, 0.0
        %1002 = vst.msk [vmem:[#allocation3 + $0x70] sm:$0xff] %vm745, 0.0
        %1003 = vst.msk [vmem:[#allocation3 + $0x78] sm:$0x3] %vm988, 0.0
        %1004 = vst.msk [vmem:[#allocation3 + $0x80] sm:$0xff] %vm745, 0.0
        %1005 = vst.msk [vmem:[#allocation3 + $0x88] sm:$0x3] %vm988, 0.0
        %1006 = vst.msk [vmem:[#allocation3 + $0x90] sm:$0xff] %vm745, 0.0
        %1007 = vst.msk [vmem:[#allocation3 + $0x98] sm:$0x3] %vm988, 0.0
        %s1008 = scalar_lea.vmem [#allocation3], 16
        %1009 = vst.msk [vmem:[%s1008 + $0x1] sm:$0xff] %vm745, %v979
        %1010 = vst.msk [vmem:[%s1008 + $0x11] sm:$0xff] %vm745, %v980
        %1011 = vst.msk [vmem:[%s1008 + $0x21] sm:$0xff] %vm745, %v981
        %1012 = vst.msk [vmem:[%s1008 + $0x31] sm:$0xff] %vm745, %v982
        %1013 = vst.msk [vmem:[%s1008 + $0x41] sm:$0xff] %vm745, %v983
        %1014 = vst.msk [vmem:[%s1008 + $0x51] sm:$0xff] %vm745, %v984
        %1015 = vst.msk [vmem:[%s1008 + $0x61] sm:$0xff] %vm745, %v985
        %1016 = vst.msk [vmem:[%s1008 + $0x71] sm:$0xff] %vm745, %v986
        %v1017 = vld [vmem:[#allocation3] ss:$2 sm:$0xf]
        %s1018 = scalar_lea.vmem [#allocation3], 32
        %v1019 = vld [vmem:[%s1018] ss:$2 sm:$0xf]
        %s1020 = scalar_lea.vmem [#allocation3], 64
        %v1021 = vld [vmem:[%s1020] ss:$2 sm:$0xf]
        %s1022 = scalar_lea.vmem [#allocation3], 96
        %v1023 = vld [vmem:[%s1022] ss:$2 sm:$0xf]
        %s1024 = scalar_lea.vmem [#allocation3], 1
        %v1025 = vld [vmem:[%s1024] ss:$2 sm:$0xf]
        %s1026 = scalar_lea.vmem [#allocation3], 33
        %v1027 = vld [vmem:[%s1026] ss:$2 sm:$0xf]
        %s1028 = scalar_lea.vmem [#allocation3], 65
        %v1029 = vld [vmem:[%s1028] ss:$2 sm:$0xf]
        %s1030 = scalar_lea.vmem [#allocation3], 97
        %v1031 = vld [vmem:[%s1030] ss:$2 sm:$0xf]
        %s1032 = scalar_lea.vmem [#allocation3], 2
        %v1033 = vld [vmem:[%s1032] ss:$2 sm:$0xf]
        %s1034 = scalar_lea.vmem [#allocation3], 34
        %v1035 = vld [vmem:[%s1034] ss:$2 sm:$0xf]
        %s1036 = scalar_lea.vmem [#allocation3], 66
        %v1037 = vld [vmem:[%s1036] ss:$2 sm:$0xf]
        %s1038 = scalar_lea.vmem [#allocation3], 98
        %v1039 = vld [vmem:[%s1038] ss:$2 sm:$0xf]
        %v1040 = vld [vmem:[%s1008] ss:$2 sm:$0xf]
        %s1041 = scalar_lea.vmem %s1008, 32 [#allocation3]
        %v1042 = vld [vmem:[%s1041] ss:$2 sm:$0xf]
        %s1043 = scalar_lea.vmem %s1008, 64 [#allocation3]
        %v1044 = vld [vmem:[%s1043] ss:$2 sm:$0xf]
        %s1045 = scalar_lea.vmem %s1008, 96 [#allocation3]
        %v1046 = vld [vmem:[%s1045] ss:$2 sm:$0xf]
        %s1047 = scalar_lea.vmem %s1008, 1 [#allocation3]
        %v1048 = vld [vmem:[%s1047] ss:$2 sm:$0xf]
        %s1049 = scalar_lea.vmem %s1008, 33 [#allocation3]
        %v1050 = vld [vmem:[%s1049] ss:$2 sm:$0xf]
        %s1051 = scalar_lea.vmem %s1008, 65 [#allocation3]
        %v1052 = vld [vmem:[%s1051] ss:$2 sm:$0xf]
        %s1053 = scalar_lea.vmem %s1008, 97 [#allocation3]
        %v1054 = vld [vmem:[%s1053] ss:$2 sm:$0xf]
        %s1055 = scalar_lea.vmem %s1008, 2 [#allocation3]
        %v1056 = vld [vmem:[%s1055] ss:$2 sm:$0xf]
        %s1057 = scalar_lea.vmem %s1008, 34 [#allocation3]
        %v1058 = vld [vmem:[%s1057] ss:$2 sm:$0xf]
        %s1059 = scalar_lea.vmem %s1008, 66 [#allocation3]
        %v1060 = vld [vmem:[%s1059] ss:$2 sm:$0xf]
        %s1061 = scalar_lea.vmem %s1008, 98 [#allocation3]
        %v1062 = vld [vmem:[%s1061] ss:$2 sm:$0xf]
        %s1063 = scalar_lea.vmem [#allocation3], 32
        %v1064 = vld [vmem:[%s1063] ss:$2 sm:$0xf]
        %s1065 = scalar_lea.vmem %s1063, 32 [#allocation3]
        %v1066 = vld [vmem:[%s1065] ss:$2 sm:$0xf]
        %s1067 = scalar_lea.vmem %s1063, 64 [#allocation3]
        %v1068 = vld [vmem:[%s1067] ss:$2 sm:$0xf]
        %s1069 = scalar_lea.vmem %s1063, 96 [#allocation3]
        %v1070 = vld [vmem:[%s1069] ss:$2 sm:$0xf]
        %s1071 = scalar_lea.vmem %s1063, 1 [#allocation3]
        %v1072 = vld [vmem:[%s1071] ss:$2 sm:$0xf]
        %s1073 = scalar_lea.vmem %s1063, 33 [#allocation3]
        %v1074 = vld [vmem:[%s1073] ss:$2 sm:$0xf]
        %s1075 = scalar_lea.vmem %s1063, 65 [#allocation3]
        %v1076 = vld [vmem:[%s1075] ss:$2 sm:$0xf]
        %s1077 = scalar_lea.vmem %s1063, 97 [#allocation3]
        %v1078 = vld [vmem:[%s1077] ss:$2 sm:$0xf]
        %s1079 = scalar_lea.vmem %s1063, 2 [#allocation3]
        %v1080 = vld [vmem:[%s1079] ss:$2 sm:$0xf]
        %s1081 = scalar_lea.vmem %s1063, 34 [#allocation3]
        %v1082 = vld [vmem:[%s1081] ss:$2 sm:$0xf]
        %s1083 = scalar_lea.vmem %s1063, 66 [#allocation3]
        %v1084 = vld [vmem:[%s1083] ss:$2 sm:$0xf]
        %s1085 = scalar_lea.vmem %s1063, 98 [#allocation3]
        %v1086 = vld [vmem:[%s1085] ss:$2 sm:$0xf]
        %1091 = vrot.lane.b32.xlu0 %v1025, 32
        %v1092 = vpop.permute.xlu0 %1091
        %1093 = vrot.lane.b32.xlu0 %v1027, 32
        %v1094 = vpop.permute.xlu0 %1093
        %1095 = vrot.lane.b32.xlu0 %v1029, 32
        %v1096 = vpop.permute.xlu0 %1095
        %1097 = vrot.lane.b32.xlu0 %v1031, 32
        %v1098 = vpop.permute.xlu0 %1097
        %1107 = vrot.lane.b32.xlu0 %v1033, 64
        %v1108 = vpop.permute.xlu0 %1107
        %1109 = vrot.lane.b32.xlu0 %v1035, 64
        %v1110 = vpop.permute.xlu0 %1109
        %1111 = vrot.lane.b32.xlu0 %v1037, 64
        %v1112 = vpop.permute.xlu0 %1111
        %1113 = vrot.lane.b32.xlu0 %v1039, 64
        %v1114 = vpop.permute.xlu0 %1113
        %1123 = vrot.lane.b32.xlu0 %v1040, 96
        %v1124 = vpop.permute.xlu0 %1123
        %1125 = vrot.lane.b32.xlu0 %v1042, 96
        %v1126 = vpop.permute.xlu0 %1125
        %1127 = vrot.lane.b32.xlu0 %v1044, 96
        %v1128 = vpop.permute.xlu0 %1127
        %1129 = vrot.lane.b32.xlu0 %v1046, 96
        %v1130 = vpop.permute.xlu0 %1129
        %1139 = vrot.lane.b32.xlu0 %v1056, 32
        %v1140 = vpop.permute.xlu0 %1139
        %1141 = vrot.lane.b32.xlu0 %v1058, 32
        %v1142 = vpop.permute.xlu0 %1141
        %1143 = vrot.lane.b32.xlu0 %v1060, 32
        %v1144 = vpop.permute.xlu0 %1143
        %1145 = vrot.lane.b32.xlu0 %v1062, 32
        %v1146 = vpop.permute.xlu0 %1145
        %1155 = vrot.lane.b32.xlu0 %v1064, 64
        %v1156 = vpop.permute.xlu0 %1155
        %1157 = vrot.lane.b32.xlu0 %v1066, 64
        %v1158 = vpop.permute.xlu0 %1157
        %1159 = vrot.lane.b32.xlu0 %v1068, 64
        %v1160 = vpop.permute.xlu0 %1159
        %1161 = vrot.lane.b32.xlu0 %v1070, 64
        %v1162 = vpop.permute.xlu0 %1161
        %1171 = vrot.lane.b32.xlu0 %v1072, 96
        %v1172 = vpop.permute.xlu0 %1171
        %1173 = vrot.lane.b32.xlu0 %v1074, 96
        %v1174 = vpop.permute.xlu0 %1173
        %1175 = vrot.lane.b32.xlu0 %v1076, 96
        %v1176 = vpop.permute.xlu0 %1175
        %1177 = vrot.lane.b32.xlu0 %v1078, 96
        %v1178 = vpop.permute.xlu0 %1177
        %v1183 = vsel %vm745, %v1017, %v1092
        %v1184 = vsel %vm745, %v1019, %v1094
        %v1185 = vsel %vm745, %v1021, %v1096
        %v1186 = vsel %vm745, %v1023, %v1098
        %v1187 = vsel %vm763, %v1183, %v1108
        %v1188 = vsel %vm763, %v1184, %v1110
        %v1189 = vsel %vm763, %v1185, %v1112
        %v1190 = vsel %vm763, %v1186, %v1114
        %v1191 = vsel %vm781, %v1187, %v1124
        %v1192 = vsel %vm781, %v1188, %v1126
        %v1193 = vsel %vm781, %v1189, %v1128
        %v1194 = vsel %vm781, %v1190, %v1130
        %v1195 = vsel %vm745, %v1048, %v1140
        %v1196 = vsel %vm745, %v1050, %v1142
        %v1197 = vsel %vm745, %v1052, %v1144
        %v1198 = vsel %vm745, %v1054, %v1146
        %v1199 = vsel %vm763, %v1195, %v1156
        %v1200 = vsel %vm763, %v1196, %v1158
        %v1201 = vsel %vm763, %v1197, %v1160
        %v1202 = vsel %vm763, %v1198, %v1162
        %v1203 = vsel %vm781, %v1199, %v1172
        %v1204 = vsel %vm781, %v1200, %v1174
        %v1205 = vsel %vm781, %v1201, %v1176
        %v1206 = vsel %vm781, %v1202, %v1178
        %v1219 = vcombine.low %v1191, %v1203
        %v1220 = vcombine.low %v1192, %v1204
        %v1221 = vcombine.low %v1193, %v1205
        %v1222 = vcombine.low %v1194, %v1206
        %v1223 = vcombine.low %v1219, %v1220
        %v1224 = vcombine.high %v1219, %v1220
        %v1225 = vcombine.low %v1080, %v1082
        %v1226 = vcombine.low %v1221, %v1222
        %v1227 = vcombine.high %v1221, %v1222
        %v1228 = vcombine.low %v1084, %v1086
        %v1235 = vpack.c.bf16 %v1226, %v1223
        %v1236 = vpack.c.bf16 %v1227, %v1224
        %v1237 = vpack.c.bf16 %v1228, %v1225
        %v1238 = vld [vmem:[%s2] sm:$0xf]
        %v1239 = vld [vmem:[%s2 + $0x4] sm:$0xf]
        %v1240 = vld [vmem:[%s2 + $0x8] sm:$0xf]
        %v1241 = vld [vmem:[%s2 + $0xc] sm:$0xf]
        %v1242 = vld [vmem:[%s2 + $0x10] sm:$0xf]
        %v1243 = vld [vmem:[%s2 + $0x14] sm:$0xf]
        %v1244 = vld [vmem:[%s2 + $0x18] sm:$0xf]
        %v1245 = vld [vmem:[%s2 + $0x1c] sm:$0xf]
        %v1246 = vld [vmem:[%s2 + $0x20] sm:$0xf]
        %v1247 = vld [vmem:[%s2 + $0x24] sm:$0xf]
        %v1248 = vld [vmem:[%s2 + $0x28] sm:$0xf]
        %v1249 = vld [vmem:[%s2 + $0x2c] sm:$0xf]
        %v1250 = vld [vmem:[%s2 + $0x30] sm:$0xf]
        %v1251 = vld [vmem:[%s2 + $0x34] sm:$0xf]
        %v1252 = vld [vmem:[%s2 + $0x38] sm:$0xf]
        %v1253 = vld [vmem:[%s2 + $0x3c] sm:$0xf]
        %v1254 = vld [vmem:[%s2 + $0x40] sm:$0xf]
        %v1255 = vld [vmem:[%s2 + $0x44] sm:$0xf]
        %v1256 = vld [vmem:[%s2 + $0x48] sm:$0xf]
        %v1257 = vld [vmem:[%s2 + $0x4c] sm:$0xf]
        %v1258 = vld [vmem:[%s2 + $0x50] sm:$0xf]
        %v1259 = vld [vmem:[%s2 + $0x54] sm:$0xf]
        %v1260 = vld [vmem:[%s2 + $0x58] sm:$0xf]
        %v1261 = vld [vmem:[%s2 + $0x5c] sm:$0xf]
        %v1262 = vld [vmem:[%s2 + $0x60] sm:$0xf]
        %v1263 = vld [vmem:[%s2 + $0x64] sm:$0xf]
        %v1264 = vld [vmem:[%s2 + $0x68] sm:$0xf]
        %v1265 = vld [vmem:[%s2 + $0x6c] sm:$0xf]
        %v1266 = vld [vmem:[%s2 + $0x70] sm:$0xf]
        %v1267 = vld [vmem:[%s2 + $0x74] sm:$0xf]
        %v1268 = vld [vmem:[%s2 + $0x78] sm:$0xf]
        %v1269 = vld [vmem:[%s2 + $0x7c] sm:$0xf]
        %v1270 = vld [vmem:[%s2 + $0x80] sm:$0xf]
        %v1271 = vld [vmem:[%s2 + $0x84] sm:$0xf]
        %v1272 = vld [vmem:[%s2 + $0x88] sm:$0xf]
        %v1273 = vld [vmem:[%s2 + $0x8c] sm:$0xf]
        %s1274 = scalar_lea.vmem %s3, 1
        %v1275 = vld [vmem:[%s1274] sm:$0x1]
        %v1277 = vlaneseq
        %v1278 = vshrl.u32 %v1277, 7
        %v1279 = vsub.s32 0, %v1278
        %v1280 = vrot.slane %v1275, %v1279
        %v1318 = vunpack.c.l.b16 %v1238
        %v1319 = vunpack.c.l.b16 %v1239
        %v1320 = vunpack.c.l.b16 %v1240
        %v1321 = vunpack.c.l.b16 %v1241
        %v1322 = vunpack.c.l.b16 %v1242
        %v1323 = vunpack.c.l.b16 %v1243
        %v1324 = vunpack.c.l.b16 %v1244
        %v1325 = vunpack.c.l.b16 %v1245
        %v1326 = vunpack.c.l.b16 %v1246
        %v1327 = vunpack.c.l.b16 %v1247
        %v1328 = vunpack.c.l.b16 %v1248
        %v1329 = vunpack.c.l.b16 %v1249
        %v1330 = vunpack.c.l.b16 %v1250
        %v1331 = vunpack.c.l.b16 %v1251
        %v1332 = vunpack.c.l.b16 %v1252
        %v1333 = vunpack.c.l.b16 %v1253
        %v1334 = vunpack.c.l.b16 %v1254
        %v1335 = vunpack.c.l.b16 %v1255
        %v1336 = vunpack.c.l.b16 %v1256
        %v1337 = vunpack.c.l.b16 %v1257
        %v1338 = vunpack.c.l.b16 %v1258
        %v1339 = vunpack.c.l.b16 %v1259
        %v1340 = vunpack.c.l.b16 %v1260
        %v1341 = vunpack.c.l.b16 %v1261
        %v1342 = vunpack.c.l.b16 %v1262
        %v1343 = vunpack.c.l.b16 %v1263
        %v1344 = vunpack.c.l.b16 %v1264
        %v1345 = vunpack.c.l.b16 %v1265
        %v1346 = vunpack.c.l.b16 %v1266
        %v1347 = vunpack.c.l.b16 %v1267
        %v1348 = vunpack.c.l.b16 %v1268
        %v1349 = vunpack.c.l.b16 %v1269
        %v1350 = vunpack.c.l.b16 %v1270
        %v1351 = vunpack.c.l.b16 %v1271
        %v1352 = vunpack.c.l.b16 %v1272
        %v1353 = vunpack.c.l.b16 %v1273
        %v1354 = vpack.c.b16 %v1319, %v1318
        %v1355 = vpack.c.b16 %v1321, %v1320
        %v1356 = vpack.c.b16 %v1323, %v1322
        %v1357 = vpack.c.b16 %v1325, %v1324
        %v1358 = vpack.c.b16 %v1327, %v1326
        %v1359 = vpack.c.b16 %v1329, %v1328
        %v1360 = vpack.c.b16 %v1331, %v1330
        %v1361 = vpack.c.b16 %v1333, %v1332
        %v1362 = vpack.c.b16 %v1335, %v1334
        %v1363 = vpack.c.b16 %v1337, %v1336
        %v1364 = vpack.c.b16 %v1339, %v1338
        %v1365 = vpack.c.b16 %v1341, %v1340
        %v1366 = vpack.c.b16 %v1343, %v1342
        %v1367 = vpack.c.b16 %v1345, %v1344
        %v1368 = vpack.c.b16 %v1347, %v1346
        %v1369 = vpack.c.b16 %v1349, %v1348
        %v1370 = vpack.c.b16 %v1351, %v1350
        %v1371 = vpack.c.b16 %v1353, %v1352
        %v1391 = vsel %vm745, %v1237, 0
        %1393 = vmatprep.subr.bf16.mxu0 0
        %1394 = vmatpush1.bf16.msra.mxu0 %v1361
        %1395 = vmatprep.subr.bf16.mxu0 0
        %1396 = vmatpush1.bf16.msra.mxu0 %v1360
        %1397 = vmatprep.subr.bf16.mxu0 0
        %1398 = vmatpush1.bf16.msra.mxu0 %v1359
        %1399 = vmatprep.subr.bf16.mxu0 0
        %1400 = vmatpush1.bf16.msra.mxu0 %v1358
        %1401 = vmatprep.subr.bf16.mxu0 0
        %1402 = vmatpush1.bf16.msra.mxu0 %v1357
        %1403 = vmatprep.subr.bf16.mxu0 0
        %1404 = vmatpush1.bf16.msra.mxu0 %v1356
        %1405 = vmatprep.subr.bf16.mxu0 0
        %1406 = vmatpush1.bf16.msra.mxu0 %v1355
        %1407 = vmatprep.subr.bf16.mxu0 0
        %1408 = vmatpush1.bf16.msra.mxu0 %v1354
        %1409 = vmatprep.subr.bf16.mxu0 0
        %1410 = vmatpush2.bf16.msra.mxu0 %v1369
        %1411 = vmatprep.subr.bf16.mxu0 0
        %1412 = vmatpush2.bf16.msra.mxu0 %v1368
        %1413 = vmatprep.subr.bf16.mxu0 0
        %1414 = vmatpush2.bf16.msra.mxu0 %v1367
        %1415 = vmatprep.subr.bf16.mxu0 0
        %1416 = vmatpush2.bf16.msra.mxu0 %v1366
        %1417 = vmatprep.subr.bf16.mxu0 0
        %1418 = vmatpush2.bf16.msra.mxu0 %v1365
        %1419 = vmatprep.subr.bf16.mxu0 0
        %1420 = vmatpush2.bf16.msra.mxu0 %v1364
        %1421 = vmatprep.subr.bf16.mxu0 0
        %1422 = vmatpush2.bf16.msra.mxu0 %v1363
        %1423 = vmatprep.subr.bf16.mxu0 0
        %1424 = vmatpush2.bf16.msra.mxu0 %v1362
        %1425 = vmatprep.mubr.bf16.mxu0 %v1236
        %1426 = vmatmul.mubr.bf16.gmra.mxu0 %v1235
        %v1427 = vpop.f32.mrf.mxu0
        %v1428 = vadd.f32 %v1280, %v1427
        %v1429 = vpop.f32.mrf.mxu0
        %v1430 = vpop.f32.mrf.mxu0
        %v1431 = vadd.f32 %v1280, %v1430
        %v1432 = vpop.f32.mrf.mxu0
        %1433 = vdwg.mxu0
        %1434 = vmatprep.subr.bf16.mxu0 0
        %1435 = vmatpush1.bf16.msra.mxu0 0
        %1436 = vmatprep.subr.bf16.mxu0 0
        %1437 = vmatpush1.bf16.msra.mxu0 0
        %1438 = vmatprep.subr.bf16.mxu0 0
        %1439 = vmatpush1.bf16.msra.mxu0 0
        %1440 = vmatprep.subr.bf16.mxu0 0
        %1441 = vmatpush1.bf16.msra.mxu0 0
        %1442 = vmatprep.subr.bf16.mxu0 0
        %1443 = vmatpush1.bf16.msra.mxu0 0
        %1444 = vmatprep.subr.bf16.mxu0 0
        %1445 = vmatpush1.bf16.msra.mxu0 0
        %1446 = vmatprep.subr.bf16.mxu0 0
        %1447 = vmatpush1.bf16.msra.mxu0 %v1371
        %1448 = vmatprep.subr.bf16.mxu0 0
        %1449 = vmatpush1.bf16.msra.mxu0 %v1370
        %1450 = vmatprep.subr.bf16.mxu0 0
        %1451 = vmatpush2.bf16.msra.mxu0 0
        %1452 = vmatprep.subr.bf16.mxu0 0
        %1453 = vmatpush2.bf16.msra.mxu0 0
        %1454 = vmatprep.subr.bf16.mxu0 0
        %1455 = vmatpush2.bf16.msra.mxu0 0
        %1456 = vmatprep.subr.bf16.mxu0 0
        %1457 = vmatpush2.bf16.msra.mxu0 0
        %1458 = vmatprep.subr.bf16.mxu0 0
        %1459 = vmatpush2.bf16.msra.mxu0 0
        %1460 = vmatprep.subr.bf16.mxu0 0
        %1461 = vmatpush2.bf16.msra.mxu0 0
        %1462 = vmatprep.subr.bf16.mxu0 0
        %1463 = vmatpush2.bf16.msra.mxu0 0
        %1464 = vmatprep.subr.bf16.mxu0 0
        %1465 = vmatpush2.bf16.msra.mxu0 0
        %1466 = vmatprep.mubr.bf16.mxu0 0
        %1467 = vmatmul.mubr.bf16.gmra.mxu0 %v1391
        %v1468 = vpop.f32.mrf.mxu0
        %v1469 = vadd.f32 %v1428, %v1468
        %v1470 = vpop.f32.mrf.mxu0
        %v1471 = vpop.f32.mrf.mxu0
        %v1472 = vadd.f32 %v1431, %v1471
        %v1473 = vpop.f32.mrf.mxu0
        %1474 = vdwg.mxu0
        %vm1475 = vcmp.gt.f32.partialorder %v1469, 0.0
        %vm1476 = vcmp.gt.f32.partialorder %v1472, 0.0
        %v1477 = vmul.f32 %v1469, 0.01
        %v1478 = vmul.f32 %v1472, 0.01
        %v1479 = vsel %vm1475, %v1469, %v1477
        %v1480 = vsel %vm1476, %v1472, %v1478
        %vm1481 = vcmask 259072
        %1482 = vst.msk [vmem:[#allocation4] sm:$0x3f] %vm1481, 0.0
        %1483 = vst.msk [vmem:[#allocation4 + $0x8] sm:$0x3f] %vm1481, 0.0
        %1484 = vst.msk [vmem:[#allocation4 + $0x10] sm:$0x3f] %vm1481, 0.0
        %1485 = vst.msk [vmem:[#allocation4 + $0x18] sm:$0x3f] %vm1481, 0.0
        %1486 = vst.msk [vmem:[#allocation4 + $0x20] sm:$0x3f] %vm1481, 0.0
        %1487 = vst.msk [vmem:[#allocation4 + $0x28] sm:$0x3f] %vm1481, 0.0
        %v1490 = vcombine.high %v1479, %v1479
        %v1491 = vcombine.high %v1480, %v1480
        %s1494 = scalar_lea.vmem [#allocation4], 8
        %vm1495 = vcmask 257024
        %1496 = vst.msk [vmem:[%s1494 + $0x1] sm:$0xf] %vm1495, %v1479
        %1497 = vst.msk [vmem:[%s1494 + $0x9] sm:$0xf] %vm1495, %v1490
        %1498 = vst.msk [vmem:[%s1494 + $0x11] sm:$0xf] %vm1495, %v1480
        %1499 = vst.msk [vmem:[%s1494 + $0x19] sm:$0xf] %vm1495, %v1491
        %v1500 = vld [vmem:[#allocation4] ss:$2 sm:$0x3]
        %s1501 = scalar_lea.vmem [#allocation4], 16
        %v1502 = vld [vmem:[%s1501] ss:$2 sm:$0x3]
        %s1503 = scalar_lea.vmem [#allocation4], 1
        %v1504 = vld [vmem:[%s1503] ss:$2 sm:$0x3]
        %s1505 = scalar_lea.vmem [#allocation4], 17
        %v1506 = vld [vmem:[%s1505] ss:$2 sm:$0x3]
        %s1507 = scalar_lea.vmem [#allocation4], 2
        %v1508 = vld [vmem:[%s1507] ss:$2 sm:$0x3]
        %s1509 = scalar_lea.vmem [#allocation4], 18
        %v1510 = vld [vmem:[%s1509] ss:$2 sm:$0x3]
        %v1511 = vld [vmem:[%s1494] ss:$2 sm:$0x3]
        %s1512 = scalar_lea.vmem %s1494, 16 [#allocation4]
        %v1513 = vld [vmem:[%s1512] ss:$2 sm:$0x3]
        %s1514 = scalar_lea.vmem %s1494, 1 [#allocation4]
        %v1515 = vld [vmem:[%s1514] ss:$2 sm:$0x3]
        %s1516 = scalar_lea.vmem %s1494, 17 [#allocation4]
        %v1517 = vld [vmem:[%s1516] ss:$2 sm:$0x3]
        %s1518 = scalar_lea.vmem %s1494, 2 [#allocation4]
        %v1519 = vld [vmem:[%s1518] ss:$2 sm:$0x3]
        %s1520 = scalar_lea.vmem %s1494, 18 [#allocation4]
        %v1521 = vld [vmem:[%s1520] ss:$2 sm:$0x3]
        %s1522 = scalar_lea.vmem [#allocation4], 16
        %v1523 = vld [vmem:[%s1522] ss:$2 sm:$0x3]
        %s1524 = scalar_lea.vmem %s1522, 16 [#allocation4]
        %v1525 = vld [vmem:[%s1524] ss:$2 sm:$0x3]
        %s1526 = scalar_lea.vmem %s1522, 1 [#allocation4]
        %v1527 = vld [vmem:[%s1526] ss:$2 sm:$0x3]
        %s1528 = scalar_lea.vmem %s1522, 17 [#allocation4]
        %v1529 = vld [vmem:[%s1528] ss:$2 sm:$0x3]
        %s1530 = scalar_lea.vmem %s1522, 2 [#allocation4]
        %v1531 = vld [vmem:[%s1530] ss:$2 sm:$0x3]
        %s1532 = scalar_lea.vmem %s1522, 18 [#allocation4]
        %v1533 = vld [vmem:[%s1532] ss:$2 sm:$0x3]
        %1536 = vrot.lane.b32.xlu0 %v1504, 32
        %v1537 = vpop.permute.xlu0 %1536
        %1538 = vrot.lane.b32.xlu0 %v1506, 32
        %v1539 = vpop.permute.xlu0 %1538
        %1544 = vrot.lane.b32.xlu0 %v1508, 64
        %v1545 = vpop.permute.xlu0 %1544
        %1546 = vrot.lane.b32.xlu0 %v1510, 64
        %v1547 = vpop.permute.xlu0 %1546
        %1552 = vrot.lane.b32.xlu0 %v1511, 96
        %v1553 = vpop.permute.xlu0 %1552
        %1554 = vrot.lane.b32.xlu0 %v1513, 96
        %v1555 = vpop.permute.xlu0 %1554
        %1560 = vrot.lane.b32.xlu0 %v1519, 32
        %v1561 = vpop.permute.xlu0 %1560
        %1562 = vrot.lane.b32.xlu0 %v1521, 32
        %v1563 = vpop.permute.xlu0 %1562
        %1568 = vrot.lane.b32.xlu0 %v1523, 64
        %v1569 = vpop.permute.xlu0 %1568
        %1570 = vrot.lane.b32.xlu0 %v1525, 64
        %v1571 = vpop.permute.xlu0 %1570
        %1576 = vrot.lane.b32.xlu0 %v1527, 96
        %v1577 = vpop.permute.xlu0 %1576
        %1578 = vrot.lane.b32.xlu0 %v1529, 96
        %v1579 = vpop.permute.xlu0 %1578
        %v1582 = vsel %vm745, %v1500, %v1537
        %v1583 = vsel %vm745, %v1502, %v1539
        %v1584 = vsel %vm763, %v1582, %v1545
        %v1585 = vsel %vm763, %v1583, %v1547
        %v1586 = vsel %vm781, %v1584, %v1553
        %v1587 = vsel %vm781, %v1585, %v1555
        %v1588 = vsel %vm745, %v1515, %v1561
        %v1589 = vsel %vm745, %v1517, %v1563
        %v1590 = vsel %vm763, %v1588, %v1569
        %v1591 = vsel %vm763, %v1589, %v1571
        %v1592 = vsel %vm781, %v1590, %v1577
        %v1593 = vsel %vm781, %v1591, %v1579
        %v1600 = vcombine.low %v1586, %v1592
        %v1602 = vunpack.c.l.s4 1983009808
        %v1603 = vunpack.c.0.s8 %v1602
        %v1604 = vlaneseq
        %v1605 = vshrl.u32 %v1604, 7
        %v1606 = vsub.s32 %v1603, %v1605
        %v1607 = vrot.slane %v1600, %v1606
        %v1609 = vunpack.c.l.s4 1983009808
        %v1610 = vunpack.c.0.s8 %v1609
        %v1611 = vlaneseq
        %v1612 = vshrl.u32 %v1611, 7
        %v1613 = vsub.s32 %v1610, %v1612
        %v1614 = vrot.slane %v1531, %v1613
        %v1615 = vcombine.low %v1607, %v1614
        %v1616 = vcombine.low %v1587, %v1593
        %v1618 = vunpack.c.l.s4 1983009808
        %v1619 = vunpack.c.0.s8 %v1618
        %v1620 = vlaneseq
        %v1621 = vshrl.u32 %v1620, 7
        %v1622 = vsub.s32 %v1619, %v1621
        %v1623 = vrot.slane %v1616, %v1622
        %v1625 = vunpack.c.l.s4 1983009808
        %v1626 = vunpack.c.0.s8 %v1625
        %v1627 = vlaneseq
        %v1628 = vshrl.u32 %v1627, 7
        %v1629 = vsub.s32 %v1626, %v1628
        %v1630 = vrot.slane %v1533, %v1629
        %v1631 = vcombine.low %v1623, %v1630
        %v1632 = vcombine.low %v1615, %v1631
        %v1633 = vcombine.high %v1615, %v1631
        %v1635 = vunpack.c.l.s4 1983009808
        %v1636 = vunpack.c.0.s8 %v1635
        %v1637 = vlaneseq
        %v1638 = vshrl.u32 %v1637, 7
        %v1639 = vsub.s32 %v1636, %v1638
        %v1640 = vrot.slane %v1632, %v1639
        %v1642 = vunpack.c.l.s4 1983009808
        %v1643 = vunpack.c.0.s8 %v1642
        %v1644 = vlaneseq
        %v1645 = vshrl.u32 %v1644, 7
        %v1646 = vsub.s32 %v1643, %v1645
        %v1647 = vrot.slane %v1633, %v1646
        %v1648 = vcombine.high %v1640, %v1640
        %v1652 = vpack.c.bf16 %v1640, %v1640
        %v1653 = vpack.c.bf16 %v1648, %v1648
        %v1654 = vpack.c.bf16 %v1647, %v1647
        %s1655 = scalar_lea.vmem %s2, 144
        %v1656 = vld [vmem:[%s1655] sm:$0xf]
        %v1657 = vld [vmem:[%s1655 + $0x4] sm:$0xf]
        %v1658 = vld [vmem:[%s1655 + $0x8] sm:$0xf]
        %v1659 = vld [vmem:[%s1655 + $0xc] sm:$0xf]
        %v1660 = vld [vmem:[%s1655 + $0x10] sm:$0xf]
        %v1661 = vld [vmem:[%s1655 + $0x14] sm:$0xf]
        %v1662 = vld [vmem:[%s1655 + $0x18] sm:$0xf]
        %v1663 = vld [vmem:[%s1655 + $0x1c] sm:$0xf]
        %v1664 = vld [vmem:[%s1655 + $0x20] sm:$0xf]
        %v1665 = vld [vmem:[%s1655 + $0x24] sm:$0xf]
        %v1666 = vld [vmem:[%s1655 + $0x28] sm:$0xf]
        %v1667 = vld [vmem:[%s1655 + $0x2c] sm:$0xf]
        %v1668 = vld [vmem:[%s1655 + $0x30] sm:$0xf]
        %v1669 = vld [vmem:[%s1655 + $0x34] sm:$0xf]
        %v1670 = vld [vmem:[%s1655 + $0x38] sm:$0xf]
        %v1671 = vld [vmem:[%s1655 + $0x3c] sm:$0xf]
        %v1672 = vld [vmem:[%s1655 + $0x40] sm:$0xf]
        %v1673 = vld [vmem:[%s1655 + $0x44] sm:$0xf]
        %v1674 = vld [vmem:[%s1655 + $0x48] sm:$0xf]
        %v1675 = vld [vmem:[%s1655 + $0x4c] sm:$0xf]
        %v1676 = vld [vmem:[%s1655 + $0x50] sm:$0xf]
        %v1677 = vld [vmem:[%s1655 + $0x54] sm:$0xf]
        %v1678 = vld [vmem:[%s1655 + $0x58] sm:$0xf]
        %v1679 = vld [vmem:[%s1655 + $0x5c] sm:$0xf]
        %v1680 = vld [vmem:[%s1655 + $0x60] sm:$0xf]
        %v1681 = vld [vmem:[%s1655 + $0x64] sm:$0xf]
        %v1682 = vld [vmem:[%s1655 + $0x68] sm:$0xf]
        %v1683 = vld [vmem:[%s1655 + $0x6c] sm:$0xf]
        %v1684 = vld [vmem:[%s1655 + $0x70] sm:$0xf]
        %v1685 = vld [vmem:[%s1655 + $0x74] sm:$0xf]
        %v1686 = vld [vmem:[%s1655 + $0x78] sm:$0xf]
        %v1687 = vld [vmem:[%s1655 + $0x7c] sm:$0xf]
        %v1688 = vld [vmem:[%s1655 + $0x80] sm:$0xf]
        %v1689 = vld [vmem:[%s1655 + $0x84] sm:$0xf]
        %v1690 = vld [vmem:[%s1655 + $0x88] sm:$0xf]
        %v1691 = vld [vmem:[%s1655 + $0x8c] sm:$0xf]
        %s1692 = scalar_lea.vmem %s3, 2
        %v1693 = vld [vmem:[%s1692] sm:$0x1]
        %v1695 = vlaneseq
        %v1696 = vshrl.u32 %v1695, 7
        %v1697 = vsub.s32 0, %v1696
        %v1698 = vrot.slane %v1693, %v1697
        %v1736 = vunpack.c.l.b16 %v1656
        %v1737 = vunpack.c.l.b16 %v1657
        %v1738 = vunpack.c.l.b16 %v1658
        %v1739 = vunpack.c.l.b16 %v1659
        %v1740 = vunpack.c.l.b16 %v1660
        %v1741 = vunpack.c.l.b16 %v1661
        %v1742 = vunpack.c.l.b16 %v1662
        %v1743 = vunpack.c.l.b16 %v1663
        %v1744 = vunpack.c.l.b16 %v1664
        %v1745 = vunpack.c.l.b16 %v1665
        %v1746 = vunpack.c.l.b16 %v1666
        %v1747 = vunpack.c.l.b16 %v1667
        %v1748 = vunpack.c.l.b16 %v1668
        %v1749 = vunpack.c.l.b16 %v1669
        %v1750 = vunpack.c.l.b16 %v1670
        %v1751 = vunpack.c.l.b16 %v1671
        %v1752 = vunpack.c.l.b16 %v1672
        %v1753 = vunpack.c.l.b16 %v1673
        %v1754 = vunpack.c.l.b16 %v1674
        %v1755 = vunpack.c.l.b16 %v1675
        %v1756 = vunpack.c.l.b16 %v1676
        %v1757 = vunpack.c.l.b16 %v1677
        %v1758 = vunpack.c.l.b16 %v1678
        %v1759 = vunpack.c.l.b16 %v1679
        %v1760 = vunpack.c.l.b16 %v1680
        %v1761 = vunpack.c.l.b16 %v1681
        %v1762 = vunpack.c.l.b16 %v1682
        %v1763 = vunpack.c.l.b16 %v1683
        %v1764 = vunpack.c.l.b16 %v1684
        %v1765 = vunpack.c.l.b16 %v1685
        %v1766 = vunpack.c.l.b16 %v1686
        %v1767 = vunpack.c.l.b16 %v1687
        %v1768 = vunpack.c.l.b16 %v1688
        %v1769 = vunpack.c.l.b16 %v1689
        %v1770 = vunpack.c.l.b16 %v1690
        %v1771 = vunpack.c.l.b16 %v1691
        %v1772 = vpack.c.b16 %v1737, %v1736
        %v1773 = vpack.c.b16 %v1739, %v1738
        %v1774 = vpack.c.b16 %v1741, %v1740
        %v1775 = vpack.c.b16 %v1743, %v1742
        %v1776 = vpack.c.b16 %v1745, %v1744
        %v1777 = vpack.c.b16 %v1747, %v1746
        %v1778 = vpack.c.b16 %v1749, %v1748
        %v1779 = vpack.c.b16 %v1751, %v1750
        %v1780 = vpack.c.b16 %v1753, %v1752
        %v1781 = vpack.c.b16 %v1755, %v1754
        %v1782 = vpack.c.b16 %v1757, %v1756
        %v1783 = vpack.c.b16 %v1759, %v1758
        %v1784 = vpack.c.b16 %v1761, %v1760
        %v1785 = vpack.c.b16 %v1763, %v1762
        %v1786 = vpack.c.b16 %v1765, %v1764
        %v1787 = vpack.c.b16 %v1767, %v1766
        %v1788 = vpack.c.b16 %v1769, %v1768
        %v1789 = vpack.c.b16 %v1771, %v1770
        %v1809 = vsel %vm745, %v1654, 0
        %1811 = vmatprep.subr.bf16.mxu0 0
        %1812 = vmatpush1.bf16.msra.mxu0 %v1779
        %1813 = vmatprep.subr.bf16.mxu0 0
        %1814 = vmatpush1.bf16.msra.mxu0 %v1778
        %1815 = vmatprep.subr.bf16.mxu0 0
        %1816 = vmatpush1.bf16.msra.mxu0 %v1777
        %1817 = vmatprep.subr.bf16.mxu0 0
        %1818 = vmatpush1.bf16.msra.mxu0 %v1776
        %1819 = vmatprep.subr.bf16.mxu0 0
        %1820 = vmatpush1.bf16.msra.mxu0 %v1775
        %1821 = vmatprep.subr.bf16.mxu0 0
        %1822 = vmatpush1.bf16.msra.mxu0 %v1774
        %1823 = vmatprep.subr.bf16.mxu0 0
        %1824 = vmatpush1.bf16.msra.mxu0 %v1773
        %1825 = vmatprep.subr.bf16.mxu0 0
        %1826 = vmatpush1.bf16.msra.mxu0 %v1772
        %1827 = vmatprep.subr.bf16.mxu0 0
        %1828 = vmatpush2.bf16.msra.mxu0 %v1787
        %1829 = vmatprep.subr.bf16.mxu0 0
        %1830 = vmatpush2.bf16.msra.mxu0 %v1786
        %1831 = vmatprep.subr.bf16.mxu0 0
        %1832 = vmatpush2.bf16.msra.mxu0 %v1785
        %1833 = vmatprep.subr.bf16.mxu0 0
        %1834 = vmatpush2.bf16.msra.mxu0 %v1784
        %1835 = vmatprep.subr.bf16.mxu0 0
        %1836 = vmatpush2.bf16.msra.mxu0 %v1783
        %1837 = vmatprep.subr.bf16.mxu0 0
        %1838 = vmatpush2.bf16.msra.mxu0 %v1782
        %1839 = vmatprep.subr.bf16.mxu0 0
        %1840 = vmatpush2.bf16.msra.mxu0 %v1781
        %1841 = vmatprep.subr.bf16.mxu0 0
        %1842 = vmatpush2.bf16.msra.mxu0 %v1780
        %1843 = vmatprep.mubr.bf16.mxu0 %v1653
        %1844 = vmatmul.mubr.bf16.gmra.mxu0 %v1652
        %v1845 = vpop.f32.mrf.mxu0
        %v1846 = vadd.f32 %v1698, %v1845
        %v1847 = vpop.f32.mrf.mxu0
        %v1848 = vpop.f32.mrf.mxu0
        %v1849 = vpop.f32.mrf.mxu0
        %1850 = vdwg.mxu0
        %1851 = vmatprep.subr.bf16.mxu0 0
        %1852 = vmatpush1.bf16.msra.mxu0 0
        %1853 = vmatprep.subr.bf16.mxu0 0
        %1854 = vmatpush1.bf16.msra.mxu0 0
        %1855 = vmatprep.subr.bf16.mxu0 0
        %1856 = vmatpush1.bf16.msra.mxu0 0
        %1857 = vmatprep.subr.bf16.mxu0 0
        %1858 = vmatpush1.bf16.msra.mxu0 0
        %1859 = vmatprep.subr.bf16.mxu0 0
        %1860 = vmatpush1.bf16.msra.mxu0 0
        %1861 = vmatprep.subr.bf16.mxu0 0
        %1862 = vmatpush1.bf16.msra.mxu0 0
        %1863 = vmatprep.subr.bf16.mxu0 0
        %1864 = vmatpush1.bf16.msra.mxu0 %v1789
        %1865 = vmatprep.subr.bf16.mxu0 0
        %1866 = vmatpush1.bf16.msra.mxu0 %v1788
        %1867 = vmatprep.subr.bf16.mxu0 0
        %1868 = vmatpush2.bf16.msra.mxu0 0
        %1869 = vmatprep.subr.bf16.mxu0 0
        %1870 = vmatpush2.bf16.msra.mxu0 0
        %1871 = vmatprep.subr.bf16.mxu0 0
        %1872 = vmatpush2.bf16.msra.mxu0 0
        %1873 = vmatprep.subr.bf16.mxu0 0
        %1874 = vmatpush2.bf16.msra.mxu0 0
        %1875 = vmatprep.subr.bf16.mxu0 0
        %1876 = vmatpush2.bf16.msra.mxu0 0
        %1877 = vmatprep.subr.bf16.mxu0 0
        %1878 = vmatpush2.bf16.msra.mxu0 0
        %1879 = vmatprep.subr.bf16.mxu0 0
        %1880 = vmatpush2.bf16.msra.mxu0 0
        %1881 = vmatprep.subr.bf16.mxu0 0
        %1882 = vmatpush2.bf16.msra.mxu0 0
        %1883 = vmatprep.mubr.bf16.mxu0 0
        %1884 = vmatmul.mubr.bf16.gmra.mxu0 %v1809
        %v1885 = vpop.f32.mrf.mxu0
        %v1886 = vadd.f32 %v1846, %v1885
        %v1887 = vpop.f32.mrf.mxu0
        %v1888 = vpop.f32.mrf.mxu0
        %v1889 = vpop.f32.mrf.mxu0
        %1890 = vdwg.mxu0
        %vm1891 = vcmp.gt.f32.partialorder %v1886, 0.0
        %v1892 = vmul.f32 %v1886, 0.01
        %v1893 = vsel %vm1891, %v1886, %v1892
        %1894 = vst.msk [vmem:[#allocation5] sm:$0xf] %vm1495, 0.0
        %1895 = vst.msk [vmem:[#allocation5 + $0x4] sm:$0xf] %vm1495, 0.0
        %1896 = vst.msk [vmem:[#allocation5 + $0x8] sm:$0xf] %vm1495, 0.0
        %1897 = vst.msk [vmem:[#allocation5 + $0xc] sm:$0xf] %vm1495, 0.0
        %v1900 = vunpack.c.l.s4 1983009808
        %v1901 = vunpack.c.0.s8 %v1900
        %v1902 = vlaneseq
        %v1903 = vshrl.u32 %v1902, 7
        %v1904 = vsub.s32 %v1901, %v1903
        %v1905 = vrot.slane %v1893, %v1904
        %v1906 = vcombine.high %v1905, %v1905
        %s1909 = scalar_lea.vmem [#allocation5], 4
        %1910 = vst.msk [vmem:[%s1909 + $0x1] sm:$0x3] %vm988, %v1905
        %1911 = vst.msk [vmem:[%s1909 + $0x5] sm:$0x3] %vm988, %v1906
        %v1912 = vld [vmem:[#allocation5] sm:$0x1]
        %v1913 = vld [vmem:[#allocation5 + $0x1] sm:$0x1]
        %v1914 = vld [vmem:[#allocation5 + $0x2] sm:$0x1]
        %v1915 = vld [vmem:[%s1909] sm:$0x1]
        %v1916 = vld [vmem:[%s1909 + $0x1] sm:$0x1]
        %v1917 = vld [vmem:[%s1909 + $0x2] sm:$0x1]
        %s1918 = scalar_lea.vmem [#allocation5], 8
        %v1919 = vld [vmem:[%s1918] sm:$0x1]
        %v1920 = vld [vmem:[%s1918 + $0x1] sm:$0x1]
        %v1921 = vld [vmem:[%s1918 + $0x2] sm:$0x1]
        %1923 = vrot.lane.b32.xlu0 %v1913, 32
        %v1924 = vpop.permute.xlu0 %1923
        %1927 = vrot.lane.b32.xlu0 %v1914, 64
        %v1928 = vpop.permute.xlu0 %1927
        %1931 = vrot.lane.b32.xlu0 %v1915, 96
        %v1932 = vpop.permute.xlu0 %1931
        %1935 = vrot.lane.b32.xlu0 %v1917, 32
        %v1936 = vpop.permute.xlu0 %1935
        %1939 = vrot.lane.b32.xlu0 %v1919, 64
        %v1940 = vpop.permute.xlu0 %1939
        %1943 = vrot.lane.b32.xlu0 %v1920, 96
        %v1944 = vpop.permute.xlu0 %1943
        %v1946 = vsel %vm745, %v1912, %v1924
        %v1947 = vsel %vm763, %v1946, %v1928
        %v1948 = vsel %vm781, %v1947, %v1932
        %v1949 = vsel %vm745, %v1916, %v1936
        %v1950 = vsel %vm763, %v1949, %v1940
        %v1951 = vsel %vm781, %v1950, %v1944
        %v1952 = vpack.c.bf16 %v1948, %v1948
        %v1953 = vpack.c.bf16 %v1951, %v1951
        %v1954 = vpack.c.bf16 %v1921, %v1921
        %s1955 = scalar_lea.vmem %s2, 288
        %v1956 = vld [vmem:[%s1955] sm:$0xf]
        %v1957 = vld [vmem:[%s1955 + $0x4] sm:$0xf]
        %v1958 = vld [vmem:[%s1955 + $0x8] sm:$0xf]
        %v1959 = vld [vmem:[%s1955 + $0xc] sm:$0xf]
        %v1960 = vld [vmem:[%s1955 + $0x10] sm:$0xf]
        %v1961 = vld [vmem:[%s1955 + $0x14] sm:$0xf]
        %v1962 = vld [vmem:[%s1955 + $0x18] sm:$0xf]
        %v1963 = vld [vmem:[%s1955 + $0x1c] sm:$0xf]
        %v1964 = vld [vmem:[%s1955 + $0x20] sm:$0xf]
        %v1965 = vld [vmem:[%s1955 + $0x24] sm:$0xf]
        %v1966 = vld [vmem:[%s1955 + $0x28] sm:$0xf]
        %v1967 = vld [vmem:[%s1955 + $0x2c] sm:$0xf]
        %v1968 = vld [vmem:[%s1955 + $0x30] sm:$0xf]
        %v1969 = vld [vmem:[%s1955 + $0x34] sm:$0xf]
        %v1970 = vld [vmem:[%s1955 + $0x38] sm:$0xf]
        %v1971 = vld [vmem:[%s1955 + $0x3c] sm:$0xf]
        %v1972 = vld [vmem:[%s1955 + $0x40] sm:$0xf]
        %v1973 = vld [vmem:[%s1955 + $0x44] sm:$0xf]
        %v1974 = vld [vmem:[%s1955 + $0x48] sm:$0xf]
        %v1975 = vld [vmem:[%s1955 + $0x4c] sm:$0xf]
        %v1976 = vld [vmem:[%s1955 + $0x50] sm:$0xf]
        %v1977 = vld [vmem:[%s1955 + $0x54] sm:$0xf]
        %v1978 = vld [vmem:[%s1955 + $0x58] sm:$0xf]
        %v1979 = vld [vmem:[%s1955 + $0x5c] sm:$0xf]
        %v1980 = vld [vmem:[%s1955 + $0x60] sm:$0xf]
        %v1981 = vld [vmem:[%s1955 + $0x64] sm:$0xf]
        %v1982 = vld [vmem:[%s1955 + $0x68] sm:$0xf]
        %v1983 = vld [vmem:[%s1955 + $0x6c] sm:$0xf]
        %v1984 = vld [vmem:[%s1955 + $0x70] sm:$0xf]
        %v1985 = vld [vmem:[%s1955 + $0x74] sm:$0xf]
        %v1986 = vld [vmem:[%s1955 + $0x78] sm:$0xf]
        %v1987 = vld [vmem:[%s1955 + $0x7c] sm:$0xf]
        %v1988 = vld [vmem:[%s1955 + $0x80] sm:$0xf]
        %v1989 = vld [vmem:[%s1955 + $0x84] sm:$0xf]
        %v1990 = vld [vmem:[%s1955 + $0x88] sm:$0xf]
        %v1991 = vld [vmem:[%s1955 + $0x8c] sm:$0xf]
        %s1992 = scalar_lea.vmem %s3, 3
        %v1993 = vld [vmem:[%s1992] sm:$0x1]
        %v2030 = vunpack.c.l.b16 %v1956
        %v2031 = vunpack.c.l.b16 %v1957
        %v2032 = vunpack.c.l.b16 %v1958
        %v2033 = vunpack.c.l.b16 %v1959
        %v2034 = vunpack.c.l.b16 %v1960
        %v2035 = vunpack.c.l.b16 %v1961
        %v2036 = vunpack.c.l.b16 %v1962
        %v2037 = vunpack.c.l.b16 %v1963
        %v2038 = vunpack.c.l.b16 %v1964
        %v2039 = vunpack.c.l.b16 %v1965
        %v2040 = vunpack.c.l.b16 %v1966
        %v2041 = vunpack.c.l.b16 %v1967
        %v2042 = vunpack.c.l.b16 %v1968
        %v2043 = vunpack.c.l.b16 %v1969
        %v2044 = vunpack.c.l.b16 %v1970
        %v2045 = vunpack.c.l.b16 %v1971
        %v2046 = vunpack.c.l.b16 %v1972
        %v2047 = vunpack.c.l.b16 %v1973
        %v2048 = vunpack.c.l.b16 %v1974
        %v2049 = vunpack.c.l.b16 %v1975
        %v2050 = vunpack.c.l.b16 %v1976
        %v2051 = vunpack.c.l.b16 %v1977
        %v2052 = vunpack.c.l.b16 %v1978
        %v2053 = vunpack.c.l.b16 %v1979
        %v2054 = vunpack.c.l.b16 %v1980
        %v2055 = vunpack.c.l.b16 %v1981
        %v2056 = vunpack.c.l.b16 %v1982
        %v2057 = vunpack.c.l.b16 %v1983
        %v2058 = vunpack.c.l.b16 %v1984
        %v2059 = vunpack.c.l.b16 %v1985
        %v2060 = vunpack.c.l.b16 %v1986
        %v2061 = vunpack.c.l.b16 %v1987
        %v2062 = vunpack.c.l.b16 %v1988
        %v2063 = vunpack.c.l.b16 %v1989
        %v2064 = vunpack.c.l.b16 %v1990
        %v2065 = vunpack.c.l.b16 %v1991
        %v2066 = vpack.c.b16 %v2031, %v2030
        %v2067 = vpack.c.b16 %v2033, %v2032
        %v2068 = vpack.c.b16 %v2035, %v2034
        %v2069 = vpack.c.b16 %v2037, %v2036
        %v2070 = vpack.c.b16 %v2039, %v2038
        %v2071 = vpack.c.b16 %v2041, %v2040
        %v2072 = vpack.c.b16 %v2043, %v2042
        %v2073 = vpack.c.b16 %v2045, %v2044
        %v2074 = vpack.c.b16 %v2047, %v2046
        %v2075 = vpack.c.b16 %v2049, %v2048
        %v2076 = vpack.c.b16 %v2051, %v2050
        %v2077 = vpack.c.b16 %v2053, %v2052
        %v2078 = vpack.c.b16 %v2055, %v2054
        %v2079 = vpack.c.b16 %v2057, %v2056
        %v2080 = vpack.c.b16 %v2059, %v2058
        %v2081 = vpack.c.b16 %v2061, %v2060
        %v2082 = vpack.c.b16 %v2063, %v2062
        %v2083 = vpack.c.b16 %v2065, %v2064
        %v2103 = vsel %vm745, %v1954, 0
        %2105 = vmatprep.subr.bf16.mxu0 0
        %2106 = vmatpush1.bf16.msra.mxu0 %v2073
        %2107 = vmatprep.subr.bf16.mxu0 0
        %2108 = vmatpush1.bf16.msra.mxu0 %v2072
        %2109 = vmatprep.subr.bf16.mxu0 0
        %2110 = vmatpush1.bf16.msra.mxu0 %v2071
        %2111 = vmatprep.subr.bf16.mxu0 0
        %2112 = vmatpush1.bf16.msra.mxu0 %v2070
        %2113 = vmatprep.subr.bf16.mxu0 0
        %2114 = vmatpush1.bf16.msra.mxu0 %v2069
        %2115 = vmatprep.subr.bf16.mxu0 0
        %2116 = vmatpush1.bf16.msra.mxu0 %v2068
        %2117 = vmatprep.subr.bf16.mxu0 0
        %2118 = vmatpush1.bf16.msra.mxu0 %v2067
        %2119 = vmatprep.subr.bf16.mxu0 0
        %2120 = vmatpush1.bf16.msra.mxu0 %v2066
        %2121 = vmatprep.subr.bf16.mxu0 0
        %2122 = vmatpush2.bf16.msra.mxu0 %v2081
        %2123 = vmatprep.subr.bf16.mxu0 0
        %2124 = vmatpush2.bf16.msra.mxu0 %v2080
        %2125 = vmatprep.subr.bf16.mxu0 0
        %2126 = vmatpush2.bf16.msra.mxu0 %v2079
        %2127 = vmatprep.subr.bf16.mxu0 0
        %2128 = vmatpush2.bf16.msra.mxu0 %v2078
        %2129 = vmatprep.subr.bf16.mxu0 0
        %2130 = vmatpush2.bf16.msra.mxu0 %v2077
        %2131 = vmatprep.subr.bf16.mxu0 0
        %2132 = vmatpush2.bf16.msra.mxu0 %v2076
        %2133 = vmatprep.subr.bf16.mxu0 0
        %2134 = vmatpush2.bf16.msra.mxu0 %v2075
        %2135 = vmatprep.subr.bf16.mxu0 0
        %2136 = vmatpush2.bf16.msra.mxu0 %v2074
        %2137 = vmatprep.mubr.bf16.mxu0 %v1953
        %2138 = vmatmul.mubr.bf16.gmra.mxu0 %v1952
        %v2139 = vpop.f32.mrf.mxu0
        %v2140 = vadd.f32 %v1993, %v2139
        %v2141 = vpop.f32.mrf.mxu0
        %v2142 = vpop.f32.mrf.mxu0
        %v2143 = vpop.f32.mrf.mxu0
        %2144 = vdwg.mxu0
        %2145 = vmatprep.subr.bf16.mxu0 0
        %2146 = vmatpush1.bf16.msra.mxu0 0
        %2147 = vmatprep.subr.bf16.mxu0 0
        %2148 = vmatpush1.bf16.msra.mxu0 0
        %2149 = vmatprep.subr.bf16.mxu0 0
        %2150 = vmatpush1.bf16.msra.mxu0 0
        %2151 = vmatprep.subr.bf16.mxu0 0
        %2152 = vmatpush1.bf16.msra.mxu0 0
        %2153 = vmatprep.subr.bf16.mxu0 0
        %2154 = vmatpush1.bf16.msra.mxu0 0
        %2155 = vmatprep.subr.bf16.mxu0 0
        %2156 = vmatpush1.bf16.msra.mxu0 0
        %2157 = vmatprep.subr.bf16.mxu0 0
        %2158 = vmatpush1.bf16.msra.mxu0 %v2083
        %2159 = vmatprep.subr.bf16.mxu0 0
        %2160 = vmatpush1.bf16.msra.mxu0 %v2082
        %2161 = vmatprep.subr.bf16.mxu0 0
        %2162 = vmatpush2.bf16.msra.mxu0 0
        %2163 = vmatprep.subr.bf16.mxu0 0
        %2164 = vmatpush2.bf16.msra.mxu0 0
        %2165 = vmatprep.subr.bf16.mxu0 0
        %2166 = vmatpush2.bf16.msra.mxu0 0
        %2167 = vmatprep.subr.bf16.mxu0 0
        %2168 = vmatpush2.bf16.msra.mxu0 0
        %2169 = vmatprep.subr.bf16.mxu0 0
        %2170 = vmatpush2.bf16.msra.mxu0 0
        %2171 = vmatprep.subr.bf16.mxu0 0
        %2172 = vmatpush2.bf16.msra.mxu0 0
        %2173 = vmatprep.subr.bf16.mxu0 0
        %2174 = vmatpush2.bf16.msra.mxu0 0
        %2175 = vmatprep.subr.bf16.mxu0 0
        %2176 = vmatpush2.bf16.msra.mxu0 0
        %2177 = vmatprep.mubr.bf16.mxu0 0
        %2178 = vmatmul.mubr.bf16.gmra.mxu0 %v2103
        %v2179 = vpop.f32.mrf.mxu0
        %v2180 = vadd.f32 %v2140, %v2179
        %v2181 = vpop.f32.mrf.mxu0
        %v2182 = vpop.f32.mrf.mxu0
        %v2183 = vpop.f32.mrf.mxu0
        %2184 = vdwg.mxu0
        %vm2185 = vcmp.gt.f32.partialorder %v2180, 0.0
        %v2186 = vmul.f32 %v2180, 0.01
        %v2187 = vsel %vm2185, %v2180, %v2186
        %v2188 = vpack.c.bf16 %v2187, %v2187
        %v2189 = vld [vmem:[%s4] sm:$0xf]
        %v2190 = vld [vmem:[%s4 + $0x4] sm:$0xf]
        %v2191 = vld [vmem:[%s4 + $0x8] sm:$0xf]
        %v2192 = vld [vmem:[%s4 + $0xc] sm:$0xf]
        %v2193 = vld [vmem:[%s5] sm:$0x1]
        %v2198 = vunpack.c.l.b16 %v2189
        %v2199 = vunpack.c.l.b16 %v2190
        %v2200 = vunpack.c.l.b16 %v2191
        %v2201 = vunpack.c.l.b16 %v2192
        %v2202 = vpack.c.b16 %v2199, %v2198
        %v2203 = vpack.c.b16 %v2201, %v2200
        %v2207 = vsel %vm745, %v2188, 0
        %2209 = vmatprep.subr.bf16.mxu0 0
        %2210 = vmatpush1.bf16.msra.mxu0 0
        %2211 = vmatprep.subr.bf16.mxu0 0
        %2212 = vmatpush1.bf16.msra.mxu0 0
        %2213 = vmatprep.subr.bf16.mxu0 0
        %2214 = vmatpush1.bf16.msra.mxu0 0
        %2215 = vmatprep.subr.bf16.mxu0 0
        %2216 = vmatpush1.bf16.msra.mxu0 0
        %2217 = vmatprep.subr.bf16.mxu0 0
        %2218 = vmatpush1.bf16.msra.mxu0 0
        %2219 = vmatprep.subr.bf16.mxu0 0
        %2220 = vmatpush1.bf16.msra.mxu0 0
        %2221 = vmatprep.subr.bf16.mxu0 0
        %2222 = vmatpush1.bf16.msra.mxu0 %v2203
        %2223 = vmatprep.subr.bf16.mxu0 0
        %2224 = vmatpush1.bf16.msra.mxu0 %v2202
        %2225 = vmatprep.subr.bf16.mxu0 0
        %2226 = vmatpush2.bf16.msra.mxu0 0
        %2227 = vmatprep.subr.bf16.mxu0 0
        %2228 = vmatpush2.bf16.msra.mxu0 0
        %2229 = vmatprep.subr.bf16.mxu0 0
        %2230 = vmatpush2.bf16.msra.mxu0 0
        %2231 = vmatprep.subr.bf16.mxu0 0
        %2232 = vmatpush2.bf16.msra.mxu0 0
        %2233 = vmatprep.subr.bf16.mxu0 0
        %2234 = vmatpush2.bf16.msra.mxu0 0
        %2235 = vmatprep.subr.bf16.mxu0 0
        %2236 = vmatpush2.bf16.msra.mxu0 0
        %2237 = vmatprep.subr.bf16.mxu0 0
        %2238 = vmatpush2.bf16.msra.mxu0 0
        %2239 = vmatprep.subr.bf16.mxu0 0
        %2240 = vmatpush2.bf16.msra.mxu0 0
        %2241 = vmatprep.mubr.bf16.mxu0 0
        %2242 = vmatmul.mubr.bf16.gmra.mxu0 %v2207
        %v2243 = vpop.f32.mrf.mxu0
        %v2244 = vadd.f32 %v2193, %v2243
        %v2245 = vpop.f32.mrf.mxu0
        %v2246 = vpop.f32.mrf.mxu0
        %v2247 = vpop.f32.mrf.mxu0
        %2248 = vdwg.mxu0
        %vm2249 = vcmask 253952
        %2250 = vst.msk [vmem:[%s243] sm:$0x1] %vm2249, %v2244
        %s2251 = sand.u32 %s159, 1
        %s2252 = scalar_lea.sflag [#allocation7], %s2251
        %s2253 = sand.u32 %s159, 1
        %s2254 = scalar_lea.vmem [#allocation6], %s2253
        // Predicated region
        $region45: #{tpu_custom_call.1} parent=43 // pred_check
          %p2255 = pneg %p169
        $region46: #{tpu_custom_call.1} parent=43 // pred_check_branch
          %2257 = sbr.rel (%p2255) target = $region48
        $region47: #{tpu_custom_call.1} parent=43 // pred_region
          %s2259 = ssub.s32 16, 16
          %2260 = vsyncadd %s2252, %s2259
          %s2261 = smul.addr %s20, 16
          %s2262 = scalar_lea.hbm %s6, %s2261
          %s2264 = sshll.u32 %s2254, 4
          %s2265 = int_to_ptr.vmem [resolvable:$true] %s2264
          %2267 = dma.vmem_to_hbm [thread:$0]  %s2265, 16, %s2262, %s2252
        $region48: #{tpu_custom_call.1} parent=43 // pred_fallthru
          _
      $region44: #{tpu_custom_call.1} parent=5 // pred_fallthru
        _
      %p2268 = scmp.le.s32.totalorder 2, %s15
      // Predicated region
      $region49: #{tpu_custom_call.1} parent=5 // pred_check
        %p2269 = pneg %p2268
      $region50: #{tpu_custom_call.1} parent=5 // pred_check_branch
        %2271 = sbr.rel (%p2269) target = $region52
      $region51: #{tpu_custom_call.1} parent=5 // pred_region
        %s2272 = ssub.s32 %s15, 2
        // Predicated region
        $region53: #{tpu_custom_call.1} parent=51 // pred_check
          %p2273 = pneg %p175
        $region54: #{tpu_custom_call.1} parent=51 // pred_check_branch
          %2275 = sbr.rel (%p2273) target = $region56
        $region55: #{tpu_custom_call.1} parent=51 // pred_region
          %s2276 = sand.u32 %s160, 1
          %s2277 = scalar_lea.sflag [#allocation7], %s2276
          %s2278 = sand.u32 %s160, 1
          %s2279 = scalar_lea.vmem [#allocation6], %s2278
          %2280 = dma.done %s2277, 16
        $region56: #{tpu_custom_call.1} parent=51 // pred_fallthru
          _
      $region52: #{tpu_custom_call.1} parent=5 // pred_fallthru
        _
    $region6: #{tpu_custom_call.1} parent=1 // loop_footer
      %s19 = sadd.s32 1, %s15
    $region7: #{tpu_custom_call.1} parent=1 // loop_footer_branch
      %14 = sbr.rel target = $region3
    $region8: #{tpu_custom_call.1} parent=1 // loop_exit
      _
    %2281 = vsyncpa [#allocation7], 1
    %s2282 = scalar_lea.sflag [#allocation7], 1
    %2283 = vsyncpa %s2282, 1

</llo_original>
